<compile_context>
chip_gen: v7x
topology: tpu7x:2x2x1
jax: 0.10.0
libtpu: 0.0.40
codegen_flags: <defaults>
</compile_context>

<pallas_src>
import functools

import jax
import jax.numpy as jnp
from jax import lax
from jax.experimental import pallas as pl
from jax.experimental.pallas import tpu as pltpu


def _round_up(x, m):
    return (x + m - 1) // m * m


# ---------------------------------------------------------------------------
# Fused Pallas kernel (one batch element per grid step)
# ---------------------------------------------------------------------------
def _residual_block_kernel(x_ref, w1_ref, s1_ref, b1_ref,
                           wdw_ref, s2_ref, b2_ref,
                           w3t_ref, s3_ref, b3_ref, o_ref,
                           *, H, W, Wq):
    """x_ref : (1, (H+2)*Wq, Cin) bf16, reflection(+1)-padded input, NHWC-flattened
       w1_ref: (Cin, Chid) bf16            wdw_ref: (9, 1, 1, Chid) f32 (3x3 taps, row-major)
       w3t_ref: (Cout, Chid) bf16 (transposed last 1x1 conv)
       s*/b* : folded BatchNorm scale/bias (f32)
       o_ref : (1, Cout, H*W) f32 (lane-dense, already channels-first)"""
    Hp = H + 2
    Chid = w1_ref.shape[1]

    # ---- 1x1 conv + BN + ReLU6 on the padded grid (pointwise ops commute with the pad) ----
    h = jnp.dot(x_ref[0], w1_ref[...], preferred_element_type=jnp.float32)   # (Hp*Wq, Chid)
    h = jnp.clip(h * s1_ref[...] + b1_ref[...], 0.0, 6.0)
    h = h.reshape(Hp, Wq, Chid)                        # free: Wq % 8 == 0

    # ---- depthwise 3x3 conv + BN + ReLU6 (VPU) --------------------------------------------
    # hoist the W-direction (sublane) shifts out of the 9-tap loop
    cols = [h[:, j:j + W, :] for j in range(3)]        # 3 x (Hp, W, Chid)
    acc = jnp.zeros((H, W, Chid), jnp.float32)
    for i in range(3):                                 # static, fully unrolled (9 taps)
        for j in range(3):
            acc = acc + cols[j][i:i + H] * wdw_ref[3 * i + j]
    d = jnp.clip(acc * s2_ref[...] + b2_ref[...], 0.0, 6.0)
    d = d.reshape(H * W, Chid).astype(jnp.bfloat16)

    # ---- final 1x1 conv + BN (no ReLU), computed transposed for a lane-dense store --------
    out = lax.dot_general(w3t_ref[...], d,
                          dimension_numbers=(((1,), (1,)), ((), ())),
                          preferred_element_type=jnp.float32)                # (Cout, H*W)
    o_ref[0] = out * s3_ref[...] + b3_ref[...]


# ---------------------------------------------------------------------------
# Wrapper
# ---------------------------------------------------------------------------
def residual_block(x_nchw, params):
    """ResidualBlock.forward (eval-mode BN).  x: (N, Cin, H, W) f32 -> (N, Cout, H, W) f32."""
    w1, s1, b1 = params['pw1']       # (Cin, Chid), (Chid,), (Chid,)
    wdw, s2, b2 = params['dw']       # (3, 3, Chid), (Chid,), (Chid,)
    w3, s3, b3 = params['pw2']       # (Chid, Cout), (Cout,), (Cout,)
    N, Cin, H, W = x_nchw.shape
    Chid = w1.shape[1]
    Cout = w3.shape[1]
    Hp = H + 2
    Wq = _round_up(W + 2, 8)         # reflect pad +1 each side, width aligned to sublanes
    S = Hp * Wq
    HW = H * W
    f32 = jnp.float32

    # single padded copy of the input, shared by all 9 depthwise taps
    x = jnp.transpose(x_nchw, (0, 2, 3, 1))                           # NHWC
    x = jnp.pad(x, ((0, 0), (1, 1), (1, 1), (0, 0)), mode='reflect')  # ReflectionPad2d(1)
    x = jnp.pad(x, ((0, 0), (0, 0), (0, Wq - (W + 2)), (0, 0)))       # sublane-alignment fill
    x = x.reshape(N, S, Cin).astype(jnp.bfloat16)                     # bf16 halves the DMA

    kernel = functools.partial(_residual_block_kernel, H=H, W=W, Wq=Wq)
    out = pl.pallas_call(
        kernel,
        out_shape=jax.ShapeDtypeStruct((N, Cout, HW), f32),
        grid_spec=pltpu.PrefetchScalarGridSpec(
            num_scalar_prefetch=0,
            grid=(N,),
            in_specs=[
                pl.BlockSpec((1, S, Cin), lambda n: (n, 0, 0)),
                pl.BlockSpec((Cin, Chid), lambda n: (0, 0)),
                pl.BlockSpec((1, Chid), lambda n: (0, 0)),
                pl.BlockSpec((1, Chid), lambda n: (0, 0)),
                pl.BlockSpec((9, 1, 1, Chid), lambda n: (0, 0, 0, 0)),
                pl.BlockSpec((1, 1, Chid), lambda n: (0, 0, 0)),
                pl.BlockSpec((1, 1, Chid), lambda n: (0, 0, 0)),
                pl.BlockSpec((Cout, Chid), lambda n: (0, 0)),
                pl.BlockSpec((Cout, 1), lambda n: (0, 0)),
                pl.BlockSpec((Cout, 1), lambda n: (0, 0)),
            ],
            out_specs=pl.BlockSpec((1, Cout, HW), lambda n: (n, 0, 0)),
        ),
        compiler_params=pltpu.CompilerParams(
            dimension_semantics=("parallel",)),
    )(x,
      w1.astype(jnp.bfloat16),
      s1.reshape(1, Chid).astype(f32), b1.reshape(1, Chid).astype(f32),
      wdw.reshape(9, 1, 1, Chid).astype(f32),
      s2.reshape(1, 1, Chid).astype(f32), b2.reshape(1, 1, Chid).astype(f32),
      jnp.transpose(w3, (1, 0)).astype(jnp.bfloat16),
      s3.reshape(Cout, 1).astype(f32), b3.reshape(Cout, 1).astype(f32))
    return out.reshape(N, Cout, H, W)     # already NCHW: no output transpose needed


# ---------------------------------------------------------------------------
# Deterministic synthetic parameters (eval-mode BN folded to scale/bias)
# ---------------------------------------------------------------------------
def fold_bn(gamma, beta, mean, var, eps=1e-5):
    scale = gamma * lax.rsqrt(var + eps)
    return scale, beta - mean * scale


def init_params(key, inp, oup, expand_ratio):
    hid = int(inp // expand_ratio)
    ks = jax.random.split(key, 6)

    def bn(k, c):
        kg, kb, km, kv = jax.random.split(k, 4)
        gamma = 1.0 + 0.2 * jax.random.normal(kg, (c,), jnp.float32)
        beta = 0.1 * jax.random.normal(kb, (c,), jnp.float32)
        mean = 0.1 * jax.random.normal(km, (c,), jnp.float32)
        var = 0.5 + jax.random.uniform(kv, (c,), jnp.float32)
        return fold_bn(gamma, beta, mean, var)

    w1 = jax.random.normal(ks[0], (inp, hid), jnp.float32) / jnp.sqrt(inp)
    wdw = jax.random.normal(ks[1], (3, 3, hid), jnp.float32) / 3.0
    w3 = jax.random.normal(ks[2], (hid, oup), jnp.float32) / jnp.sqrt(hid)
    return {
        'pw1': (w1, *bn(ks[3], hid)),
        'dw': (wdw, *bn(ks[4], hid)),
        'pw2': (w3, *bn(ks[5], oup)),
    }


# ---------------------------------------------------------------------------
# Pure-JAX f32 reference (for correctness check)
# ---------------------------------------------------------------------------
def residual_block_ref(x_nchw, params):
    w1, s1, b1 = params['pw1']
    wdw, s2, b2 = params['dw']
    w3, s3, b3 = params['pw2']
    Chid = w1.shape[1]
    x = jnp.transpose(x_nchw, (0, 2, 3, 1))                         # NHWC, f32
    h = jnp.einsum('nhwc,cd->nhwd', x, w1, precision=lax.Precision.HIGHEST)
    h = jnp.clip(h * s1 + b1, 0.0, 6.0)
    hp = jnp.pad(h, ((0, 0), (1, 1), (1, 1), (0, 0)), mode='reflect')
    d = lax.conv_general_dilated(
        hp, wdw.reshape(3, 3, 1, Chid), (1, 1), 'VALID',
        dimension_numbers=('NHWC', 'HWIO', 'NHWC'),
        feature_group_count=Chid, precision=lax.Precision.HIGHEST)
    d = jnp.clip(d * s2 + b2, 0.0, 6.0)
    out = jnp.einsum('nhwc,cd->nhwd', d, w3,
                     precision=lax.Precision.HIGHEST) * s3 + b3      # no ReLU after last BN
    return jnp.transpose(out, (0, 3, 1, 2))


# ---------------------------------------------------------------------------
if __name__ == "__main__":
    key = jax.random.PRNGKey(0)
    kx, kp = jax.random.split(key)
    N, inp, H, W = 2, 64, 16, 16
    oup, expand_ratio = 64, 2          # hidden_dim = inp // expand_ratio = 32

    x = 0.5 * jax.random.normal(kx, (N, inp, H, W), jnp.float32)
    params = init_params(kp, inp, oup, expand_ratio)

    out = jax.block_until_ready(residual_block(x, params))
    ref = jax.block_until_ready(residual_block_ref(x, params))

    assert out.shape == ref.shape == (N, oup, H, W), (out.shape, ref.shape)
    err = float(jnp.max(jnp.abs(out - ref)))
    ref_mag = float(jnp.max(jnp.abs(ref))) + 1e-6
    assert err / ref_mag < 2e-2, f"max abs err {err} vs ref magnitude {ref_mag}"
    print("KERNEL_OK")
</pallas_src>

<mosaic_0001>
module attributes {stable_mosaic.version = 11 : i64} {
  func.func @_residual_block_kernel(%arg0: i32, %arg1: memref<1x432x64xbf16, #tpu.memory_space<vmem>>, %arg2: memref<64x32xbf16, #tpu.memory_space<vmem>>, %arg3: memref<1x32xf32, #tpu.memory_space<vmem>>, %arg4: memref<1x32xf32, #tpu.memory_space<vmem>>, %arg5: memref<9x1x1x32xf32, #tpu.memory_space<vmem>>, %arg6: memref<1x1x32xf32, #tpu.memory_space<vmem>>, %arg7: memref<1x1x32xf32, #tpu.memory_space<vmem>>, %arg8: memref<64x32xbf16, #tpu.memory_space<vmem>>, %arg9: memref<64x1xf32, #tpu.memory_space<vmem>>, %arg10: memref<64x1xf32, #tpu.memory_space<vmem>>, %arg11: memref<1x64x256xf32, #tpu.memory_space<vmem>>) attributes {dimension_semantics = [#tpu.dimension_semantics<parallel>], iteration_bounds = array<i64: 2>, scalar_prefetch = 0 : i64, scratch_operands = 0 : i64, tpu.core_type = #tpu.core_type<tc>, window_params = [{transform_indices = @transform_0, window_bounds = array<i64: 1, 432, 64>}, {pipeline_mode = #tpu.pipeline_mode<synchronous>, transform_indices = @transform_1, window_bounds = array<i64: 64, 32>}, {pipeline_mode = #tpu.pipeline_mode<synchronous>, transform_indices = @transform_2, window_bounds = array<i64: 1, 32>}, {pipeline_mode = #tpu.pipeline_mode<synchronous>, transform_indices = @transform_3, window_bounds = array<i64: 1, 32>}, {pipeline_mode = #tpu.pipeline_mode<synchronous>, transform_indices = @transform_4, window_bounds = array<i64: 9, 1, 1, 32>}, {pipeline_mode = #tpu.pipeline_mode<synchronous>, transform_indices = @transform_5, window_bounds = array<i64: 1, 1, 32>}, {pipeline_mode = #tpu.pipeline_mode<synchronous>, transform_indices = @transform_6, window_bounds = array<i64: 1, 1, 32>}, {pipeline_mode = #tpu.pipeline_mode<synchronous>, transform_indices = @transform_7, window_bounds = array<i64: 64, 32>}, {pipeline_mode = #tpu.pipeline_mode<synchronous>, transform_indices = @transform_8, window_bounds = array<i64: 64, 1>}, {pipeline_mode = #tpu.pipeline_mode<synchronous>, transform_indices = @transform_9, window_bounds = array<i64: 64, 1>}, {transform_indices = @transform_10, window_bounds = array<i64: 1, 64, 256>}]} {
    %c0 = arith.constant 0 : index
    %c0_0 = arith.constant 0 : index
    %c0_1 = arith.constant 0 : index
    %0 = vector.load %arg1[%c0, %c0_0, %c0_1] : memref<1x432x64xbf16, #tpu.memory_space<vmem>>, vector<1x432x64xbf16>
    %1 = vector.shape_cast %0 : vector<1x432x64xbf16> to vector<432x64xbf16>
    %c0_2 = arith.constant 0 : index
    %c0_3 = arith.constant 0 : index
    %2 = vector.load %arg2[%c0_2, %c0_3] : memref<64x32xbf16, #tpu.memory_space<vmem>>, vector<64x32xbf16>
    %cst = arith.constant dense<0.000000e+00> : vector<432x32xf32>
    %3 = tpu.matmul %1, %2, %cst {dimension_numbers = #tpu.dot_dimension_numbers<[1], [0], [0], [1], [0, 0, 1, 1], [], []>} : vector<432x64xbf16>, vector<64x32xbf16>, vector<432x32xf32> -> vector<432x32xf32>
    %c0_4 = arith.constant 0 : index
    %c0_5 = arith.constant 0 : index
    %4 = vector.load %arg3[%c0_4, %c0_5] : memref<1x32xf32, #tpu.memory_space<vmem>>, vector<1x32xf32>
    %5 = vector.broadcast %4 : vector<1x32xf32> to vector<432x32xf32>
    %6 = arith.mulf %3, %5 : vector<432x32xf32>
    %c0_6 = arith.constant 0 : index
    %c0_7 = arith.constant 0 : index
    %7 = vector.load %arg4[%c0_6, %c0_7] : memref<1x32xf32, #tpu.memory_space<vmem>>, vector<1x32xf32>
    %8 = vector.broadcast %7 : vector<1x32xf32> to vector<432x32xf32>
    %9 = arith.addf %6, %8 : vector<432x32xf32>
    %cst_8 = arith.constant 0.000000e+00 : f32
    %cst_9 = arith.constant 6.000000e+00 : f32
    %10 = vector.broadcast %cst_8 : f32 to vector<432x32xf32>
    %11 = arith.maximumf %10, %9 : vector<432x32xf32>
    %12 = vector.broadcast %cst_9 : f32 to vector<432x32xf32>
    %13 = arith.minimumf %12, %11 : vector<432x32xf32>
    %14 = vector.shape_cast %13 : vector<432x32xf32> to vector<18x24x32xf32>
    %15 = vector.extract_strided_slice %14 {offsets = [0, 0, 0], sizes = [18, 16, 32], strides = [1, 1, 1]} : vector<18x24x32xf32> to vector<18x16x32xf32>
    %16 = vector.extract_strided_slice %14 {offsets = [0, 1, 0], sizes = [18, 16, 32], strides = [1, 1, 1]} : vector<18x24x32xf32> to vector<18x16x32xf32>
    %17 = vector.extract_strided_slice %14 {offsets = [0, 2, 0], sizes = [18, 16, 32], strides = [1, 1, 1]} : vector<18x24x32xf32> to vector<18x16x32xf32>
    %cst_10 = arith.constant 0.000000e+00 : f32
    %18 = vector.broadcast %cst_10 : f32 to vector<16x16x32xf32>
    %19 = vector.extract_strided_slice %15 {offsets = [0, 0, 0], sizes = [16, 16, 32], strides = [1, 1, 1]} : vector<18x16x32xf32> to vector<16x16x32xf32>
    %c0_11 = arith.constant 0 : index
    %c0_12 = arith.constant 0 : index
    %c0_13 = arith.constant 0 : index
    %c0_14 = arith.constant 0 : index
    %20 = vector.load %arg5[%c0_11, %c0_12, %c0_13, %c0_14] : memref<9x1x1x32xf32, #tpu.memory_space<vmem>>, vector<1x1x1x32xf32>
    %21 = vector.shape_cast %20 : vector<1x1x1x32xf32> to vector<1x1x32xf32>
    %22 = vector.broadcast %21 : vector<1x1x32xf32> to vector<16x16x32xf32>
    %23 = arith.mulf %19, %22 : vector<16x16x32xf32>
    %24 = arith.addf %18, %23 : vector<16x16x32xf32>
    %25 = vector.extract_strided_slice %16 {offsets = [0, 0, 0], sizes = [16, 16, 32], strides = [1, 1, 1]} : vector<18x16x32xf32> to vector<16x16x32xf32>
    %c1 = arith.constant 1 : index
    %c0_15 = arith.constant 0 : index
    %c0_16 = arith.constant 0 : index
    %c0_17 = arith.constant 0 : index
    %26 = vector.load %arg5[%c1, %c0_15, %c0_16, %c0_17] : memref<9x1x1x32xf32, #tpu.memory_space<vmem>>, vector<1x1x1x32xf32>
    %27 = vector.shape_cast %26 : vector<1x1x1x32xf32> to vector<1x1x32xf32>
    %28 = vector.broadcast %27 : vector<1x1x32xf32> to vector<16x16x32xf32>
    %29 = arith.mulf %25, %28 : vector<16x16x32xf32>
    %30 = arith.addf %24, %29 : vector<16x16x32xf32>
    %31 = vector.extract_strided_slice %17 {offsets = [0, 0, 0], sizes = [16, 16, 32], strides = [1, 1, 1]} : vector<18x16x32xf32> to vector<16x16x32xf32>
    %c2 = arith.constant 2 : index
    %c0_18 = arith.constant 0 : index
    %c0_19 = arith.constant 0 : index
    %c0_20 = arith.constant 0 : index
    %32 = vector.load %arg5[%c2, %c0_18, %c0_19, %c0_20] : memref<9x1x1x32xf32, #tpu.memory_space<vmem>>, vector<1x1x1x32xf32>
    %33 = vector.shape_cast %32 : vector<1x1x1x32xf32> to vector<1x1x32xf32>
    %34 = vector.broadcast %33 : vector<1x1x32xf32> to vector<16x16x32xf32>
    %35 = arith.mulf %31, %34 : vector<16x16x32xf32>
    %36 = arith.addf %30, %35 : vector<16x16x32xf32>
    %37 = vector.extract_strided_slice %15 {offsets = [1, 0, 0], sizes = [16, 16, 32], strides = [1, 1, 1]} : vector<18x16x32xf32> to vector<16x16x32xf32>
    %c3 = arith.constant 3 : index
    %c0_21 = arith.constant 0 : index
    %c0_22 = arith.constant 0 : index
    %c0_23 = arith.constant 0 : index
    %38 = vector.load %arg5[%c3, %c0_21, %c0_22, %c0_23] : memref<9x1x1x32xf32, #tpu.memory_space<vmem>>, vector<1x1x1x32xf32>
    %39 = vector.shape_cast %38 : vector<1x1x1x32xf32> to vector<1x1x32xf32>
    %40 = vector.broadcast %39 : vector<1x1x32xf32> to vector<16x16x32xf32>
    %41 = arith.mulf %37, %40 : vector<16x16x32xf32>
    %42 = arith.addf %36, %41 : vector<16x16x32xf32>
    %43 = vector.extract_strided_slice %16 {offsets = [1, 0, 0], sizes = [16, 16, 32], strides = [1, 1, 1]} : vector<18x16x32xf32> to vector<16x16x32xf32>
    %c4 = arith.constant 4 : index
    %c0_24 = arith.constant 0 : index
    %c0_25 = arith.constant 0 : index
    %c0_26 = arith.constant 0 : index
    %44 = vector.load %arg5[%c4, %c0_24, %c0_25, %c0_26] : memref<9x1x1x32xf32, #tpu.memory_space<vmem>>, vector<1x1x1x32xf32>
    %45 = vector.shape_cast %44 : vector<1x1x1x32xf32> to vector<1x1x32xf32>
    %46 = vector.broadcast %45 : vector<1x1x32xf32> to vector<16x16x32xf32>
    %47 = arith.mulf %43, %46 : vector<16x16x32xf32>
    %48 = arith.addf %42, %47 : vector<16x16x32xf32>
    %49 = vector.extract_strided_slice %17 {offsets = [1, 0, 0], sizes = [16, 16, 32], strides = [1, 1, 1]} : vector<18x16x32xf32> to vector<16x16x32xf32>
    %c5 = arith.constant 5 : index
    %c0_27 = arith.constant 0 : index
    %c0_28 = arith.constant 0 : index
    %c0_29 = arith.constant 0 : index
    %50 = vector.load %arg5[%c5, %c0_27, %c0_28, %c0_29] : memref<9x1x1x32xf32, #tpu.memory_space<vmem>>, vector<1x1x1x32xf32>
    %51 = vector.shape_cast %50 : vector<1x1x1x32xf32> to vector<1x1x32xf32>
    %52 = vector.broadcast %51 : vector<1x1x32xf32> to vector<16x16x32xf32>
    %53 = arith.mulf %49, %52 : vector<16x16x32xf32>
    %54 = arith.addf %48, %53 : vector<16x16x32xf32>
    %55 = vector.extract_strided_slice %15 {offsets = [2, 0, 0], sizes = [16, 16, 32], strides = [1, 1, 1]} : vector<18x16x32xf32> to vector<16x16x32xf32>
    %c6 = arith.constant 6 : index
    %c0_30 = arith.constant 0 : index
    %c0_31 = arith.constant 0 : index
    %c0_32 = arith.constant 0 : index
    %56 = vector.load %arg5[%c6, %c0_30, %c0_31, %c0_32] : memref<9x1x1x32xf32, #tpu.memory_space<vmem>>, vector<1x1x1x32xf32>
    %57 = vector.shape_cast %56 : vector<1x1x1x32xf32> to vector<1x1x32xf32>
    %58 = vector.broadcast %57 : vector<1x1x32xf32> to vector<16x16x32xf32>
    %59 = arith.mulf %55, %58 : vector<16x16x32xf32>
    %60 = arith.addf %54, %59 : vector<16x16x32xf32>
    %61 = vector.extract_strided_slice %16 {offsets = [2, 0, 0], sizes = [16, 16, 32], strides = [1, 1, 1]} : vector<18x16x32xf32> to vector<16x16x32xf32>
    %c7 = arith.constant 7 : index
    %c0_33 = arith.constant 0 : index
    %c0_34 = arith.constant 0 : index
    %c0_35 = arith.constant 0 : index
    %62 = vector.load %arg5[%c7, %c0_33, %c0_34, %c0_35] : memref<9x1x1x32xf32, #tpu.memory_space<vmem>>, vector<1x1x1x32xf32>
    %63 = vector.shape_cast %62 : vector<1x1x1x32xf32> to vector<1x1x32xf32>
    %64 = vector.broadcast %63 : vector<1x1x32xf32> to vector<16x16x32xf32>
    %65 = arith.mulf %61, %64 : vector<16x16x32xf32>
    %66 = arith.addf %60, %65 : vector<16x16x32xf32>
    %67 = vector.extract_strided_slice %17 {offsets = [2, 0, 0], sizes = [16, 16, 32], strides = [1, 1, 1]} : vector<18x16x32xf32> to vector<16x16x32xf32>
    %c8 = arith.constant 8 : index
    %c0_36 = arith.constant 0 : index
    %c0_37 = arith.constant 0 : index
    %c0_38 = arith.constant 0 : index
    %68 = vector.load %arg5[%c8, %c0_36, %c0_37, %c0_38] : memref<9x1x1x32xf32, #tpu.memory_space<vmem>>, vector<1x1x1x32xf32>
    %69 = vector.shape_cast %68 : vector<1x1x1x32xf32> to vector<1x1x32xf32>
    %70 = vector.broadcast %69 : vector<1x1x32xf32> to vector<16x16x32xf32>
    %71 = arith.mulf %67, %70 : vector<16x16x32xf32>
    %72 = arith.addf %66, %71 : vector<16x16x32xf32>
    %c0_39 = arith.constant 0 : index
    %c0_40 = arith.constant 0 : index
    %c0_41 = arith.constant 0 : index
    %73 = vector.load %arg6[%c0_39, %c0_40, %c0_41] : memref<1x1x32xf32, #tpu.memory_space<vmem>>, vector<1x1x32xf32>
    %74 = vector.broadcast %73 : vector<1x1x32xf32> to vector<16x16x32xf32>
    %75 = arith.mulf %72, %74 : vector<16x16x32xf32>
    %c0_42 = arith.constant 0 : index
    %c0_43 = arith.constant 0 : index
    %c0_44 = arith.constant 0 : index
    %76 = vector.load %arg7[%c0_42, %c0_43, %c0_44] : memref<1x1x32xf32, #tpu.memory_space<vmem>>, vector<1x1x32xf32>
    %77 = vector.broadcast %76 : vector<1x1x32xf32> to vector<16x16x32xf32>
    %78 = arith.addf %75, %77 : vector<16x16x32xf32>
    %cst_45 = arith.constant 0.000000e+00 : f32
    %cst_46 = arith.constant 6.000000e+00 : f32
    %79 = vector.broadcast %cst_45 : f32 to vector<16x16x32xf32>
    %80 = arith.maximumf %79, %78 : vector<16x16x32xf32>
    %81 = vector.broadcast %cst_46 : f32 to vector<16x16x32xf32>
    %82 = arith.minimumf %81, %80 : vector<16x16x32xf32>
    %83 = vector.shape_cast %82 : vector<16x16x32xf32> to vector<256x32xf32>
    %84 = arith.truncf %83 : vector<256x32xf32> to vector<256x32xbf16>
    %c0_47 = arith.constant 0 : index
    %c0_48 = arith.constant 0 : index
    %85 = vector.load %arg8[%c0_47, %c0_48] : memref<64x32xbf16, #tpu.memory_space<vmem>>, vector<64x32xbf16>
    %cst_49 = arith.constant dense<0.000000e+00> : vector<64x256xf32>
    %86 = tpu.matmul %85, %84, %cst_49 {dimension_numbers = #tpu.dot_dimension_numbers<[1], [1], [0], [0], [0, 0, 1, 0], [], []>} : vector<64x32xbf16>, vector<256x32xbf16>, vector<64x256xf32> -> vector<64x256xf32>
    %c0_50 = arith.constant 0 : index
    %c0_51 = arith.constant 0 : index
    %87 = vector.load %arg9[%c0_50, %c0_51] : memref<64x1xf32, #tpu.memory_space<vmem>>, vector<64x1xf32>
    %88 = vector.broadcast %87 : vector<64x1xf32> to vector<64x256xf32>
    %89 = arith.mulf %86, %88 : vector<64x256xf32>
    %c0_52 = arith.constant 0 : index
    %c0_53 = arith.constant 0 : index
    %90 = vector.load %arg10[%c0_52, %c0_53] : memref<64x1xf32, #tpu.memory_space<vmem>>, vector<64x1xf32>
    %91 = vector.broadcast %90 : vector<64x1xf32> to vector<64x256xf32>
    %92 = arith.addf %89, %91 : vector<64x256xf32>
    %c0_54 = arith.constant 0 : index
    %c0_55 = arith.constant 0 : index
    %c0_56 = arith.constant 0 : index
    %93 = vector.load %arg11[%c0_54, %c0_55, %c0_56] : memref<1x64x256xf32, #tpu.memory_space<vmem>>, vector<1x64x256xf32>
    %94 = vector.shape_cast %93 : vector<1x64x256xf32> to vector<64x256xf32>
    %95 = vector.shape_cast %92 : vector<64x256xf32> to vector<1x64x256xf32>
    tpu.vector_store %arg11[%c0_54, %c0_55, %c0_56], %95 {strides = array<i32>} : memref<1x64x256xf32, #tpu.memory_space<vmem>>, vector<1x64x256xf32>,
    return
  }
  func.func @transform_0(%arg0: i32) -> (i32, i32, i32) {
    %c0_i32 = arith.constant 0 : i32
    %c0_i32_0 = arith.constant 0 : i32
    %c0_i32_1 = arith.constant 0 : i32
    return %arg0, %c0_i32, %c0_i32_0 : i32, i32, i32
  }
  func.func @transform_1(%arg0: i32) -> (i32, i32) {
    %c0_i32 = arith.constant 0 : i32
    %c0_i32_0 = arith.constant 0 : i32
    %c0_i32_1 = arith.constant 0 : i32
    return %c0_i32, %c0_i32_0 : i32, i32
  }
  func.func @transform_2(%arg0: i32) -> (i32, i32) {
    %c0_i32 = arith.constant 0 : i32
    %c0_i32_0 = arith.constant 0 : i32
    %c0_i32_1 = arith.constant 0 : i32
    return %c0_i32, %c0_i32_0 : i32, i32
  }
  func.func @transform_3(%arg0: i32) -> (i32, i32) {
    %c0_i32 = arith.constant 0 : i32
    %c0_i32_0 = arith.constant 0 : i32
    %c0_i32_1 = arith.constant 0 : i32
    return %c0_i32, %c0_i32_0 : i32, i32
  }
  func.func @transform_4(%arg0: i32) -> (i32, i32, i32, i32) {
    %c0_i32 = arith.constant 0 : i32
    %c0_i32_0 = arith.constant 0 : i32
    %c0_i32_1 = arith.constant 0 : i32
    %c0_i32_2 = arith.constant 0 : i32
    %c0_i32_3 = arith.constant 0 : i32
    return %c0_i32, %c0_i32_0, %c0_i32_1, %c0_i32_2 : i32, i32, i32, i32
  }
  func.func @transform_5(%arg0: i32) -> (i32, i32, i32) {
    %c0_i32 = arith.constant 0 : i32
    %c0_i32_0 = arith.constant 0 : i32
    %c0_i32_1 = arith.constant 0 : i32
    %c0_i32_2 = arith.constant 0 : i32
    return %c0_i32, %c0_i32_0, %c0_i32_1 : i32, i32, i32
  }
  func.func @transform_6(%arg0: i32) -> (i32, i32, i32) {
    %c0_i32 = arith.constant 0 : i32
    %c0_i32_0 = arith.constant 0 : i32
    %c0_i32_1 = arith.constant 0 : i32
    %c0_i32_2 = arith.constant 0 : i32
    return %c0_i32, %c0_i32_0, %c0_i32_1 : i32, i32, i32
  }
  func.func @transform_7(%arg0: i32) -> (i32, i32) {
    %c0_i32 = arith.constant 0 : i32
    %c0_i32_0 = arith.constant 0 : i32
    %c0_i32_1 = arith.constant 0 : i32
    return %c0_i32, %c0_i32_0 : i32, i32
  }
  func.func @transform_8(%arg0: i32) -> (i32, i32) {
    %c0_i32 = arith.constant 0 : i32
    %c0_i32_0 = arith.constant 0 : i32
    %c0_i32_1 = arith.constant 0 : i32
    return %c0_i32, %c0_i32_0 : i32, i32
  }
  func.func @transform_9(%arg0: i32) -> (i32, i32) {
    %c0_i32 = arith.constant 0 : i32
    %c0_i32_0 = arith.constant 0 : i32
    %c0_i32_1 = arith.constant 0 : i32
    return %c0_i32, %c0_i32_0 : i32, i32
  }
  func.func @transform_10(%arg0: i32) -> (i32, i32, i32) {
    %c0_i32 = arith.constant 0 : i32
    %c0_i32_0 = arith.constant 0 : i32
    %c0_i32_1 = arith.constant 0 : i32
    return %arg0, %c0_i32, %c0_i32_0 : i32, i32, i32
  }
}

</mosaic_0001>

<llo_original>
// kernel: tpu_custom_call.1
$region0: #{tpu_custom_call.1}
  #allocation0 [shape = 'u32[]', space=smem, size = 0x4, offset = 0x4, fixed_abs, tag = 'smem constant byte address 0x4 - core index']
  #allocation1 [shape = 'u32[144,128]{1,0:T(1,128)}', space=vmem, size = 0x12000, scoped, tag = 'internal scratch']
  %s0 = inlined_call_operand.vmem [shape: bf16[2,432,64], index: 0, kind: input, shape index: {}]
  %s1 = inlined_call_operand.vmem [shape: bf16[64,32], index: 1, kind: input, shape index: {}]
  %s2 = inlined_call_operand.vmem [shape: f32[1,32], index: 2, kind: input, shape index: {}]
  %s3 = inlined_call_operand.vmem [shape: f32[1,32], index: 3, kind: input, shape index: {}]
  %s4 = inlined_call_operand.vmem [shape: f32[9,1,1,32], index: 4, kind: input, shape index: {}]
  %s5 = inlined_call_operand.vmem [shape: f32[1,1,32], index: 5, kind: input, shape index: {}]
  %s6 = inlined_call_operand.vmem [shape: f32[1,1,32], index: 6, kind: input, shape index: {}]
  %s7 = inlined_call_operand.vmem [shape: bf16[64,32], index: 7, kind: input, shape index: {}]
  %s8 = inlined_call_operand.vmem [shape: f32[64,1], index: 8, kind: input, shape index: {}]
  %s9 = inlined_call_operand.vmem [shape: f32[64,1], index: 9, kind: input, shape index: {}]
  %s10 = inlined_call_operand.hbm [shape: f32[2,64,256], index: 10, kind: output, shape index: {}]
  %s11 = sld [smem:[#allocation0]]
  $region73: #{tpu_custom_call.1} parent=0
    _
  %s13 = ssub.s32 1, %s11
  %s14 = scalar_select 0, %s13, %s11
  $region1: #{tpu_custom_call.1} parent=0
    #allocation2 [shape = 'u8[131072]{0}', space=vmem, size = 0x20000, scoped, tag = 'output window, operand 0']
    #allocation3 [shape = 's32[2]{0}', space=sflag, size = 0x8, scoped, tag = 'scoped memory for tpu_custom_call.1']
    %15 = vsyncpa [#allocation3], 0
    %s16 = scalar_lea.sflag [#allocation3], 1
    %17 = vsyncpa %s16, 0
    loop: start=0, step=1, limit=4
    $region2: #{tpu_custom_call.1} parent=1 // loop_pre_header
      _
    $region3: #{tpu_custom_call.1} parent=1 // loop_header
      %s19 = sphi 0, %s23
      %p20 = scmp.ge.s32.totalorder %s19, 4
      %s29 = sphi 0, %s31
      %s32 = sphi 0, %s29
      %s33 = sphi 0, %s32
      %s49 = sphi 0, %s33
      %s53 = sphi 0, %s53
      %s55 = sphi 0, %s53
      %s56 = sphi 0, %s55
      %s70 = sphi 0, %s56
      %s74 = sphi 0, %s74
      %s76 = sphi 0, %s74
      %s77 = sphi 0, %s76
      %s91 = sphi 0, %s77
      %s95 = sphi 0, %s95
      %s97 = sphi 0, %s95
      %s98 = sphi 0, %s97
      %s112 = sphi 0, %s98
      %s116 = sphi 0, %s116
      %s118 = sphi 0, %s116
      %s119 = sphi 0, %s118
      %s133 = sphi 0, %s119
      %s137 = sphi 0, %s137
      %s139 = sphi 0, %s137
      %s140 = sphi 0, %s139
      %s154 = sphi 0, %s140
      %s158 = sphi 0, %s158
      %s160 = sphi 0, %s158
      %s161 = sphi 0, %s160
      %s175 = sphi 0, %s161
      %s179 = sphi 0, %s179
      %s181 = sphi 0, %s179
      %s182 = sphi 0, %s181
      %s196 = sphi 0, %s182
      %s200 = sphi 0, %s200
      %s202 = sphi 0, %s200
      %s203 = sphi 0, %s202
      %s217 = sphi 0, %s203
      %s221 = sphi 0, %s221
      %s223 = sphi 0, %s221
      %s224 = sphi 0, %s223
      %s238 = sphi 0, %s224
      %s244 = sphi 0, %s246
      %s247 = sphi 0, %s244
      %s248 = sphi 0, %s247
      %s264 = sphi 0, %s248
    $region4: #{tpu_custom_call.1} parent=1 // loop_header_branch
      %22 = sbr.rel (%p20) target = $region8
    $region5: #{tpu_custom_call.1} parent=1 // loop_body
      %s24 = ssub.s32 %s19, 1
      %s25 = ssub.s32 %s19, 2
      %s26 = sadd.s32 %s19, 1
      %s27 = ssub.s32 %s19, %s26
      %p28 = scmp.eq.s32.totalorder %s27, 0
      %s30 = sadd.s32 %s29, 1
      %s31 = scalar_select %p28, %s29, %s30
      %p34 = pneg %p28
      %p35 = scmp.eq.s32.totalorder %s19, 1
      %p36 = por %p34, %p35
      %p37 = scmp.ne.s32.totalorder %s29, %s32
      %p38 = scmp.eq.s32.totalorder %s19, 0
      %p39 = por %p37, %p38
      %p40 = scmp.ne.s32.totalorder %s29, %s32
      %p41 = scmp.eq.s32.totalorder %s24, 1
      %p42 = por %p40, %p41
      %p43 = scmp.ne.s32.totalorder %s32, %s33
      %p44 = scmp.eq.s32.totalorder %s24, 0
      %p45 = por %p43, %p44
      %p46 = scmp.ne.s32.totalorder %s32, %s33
      %p47 = scmp.eq.s32.totalorder %s25, 1
      %p48 = por %p46, %p47
      %p50 = scmp.ne.s32.totalorder %s33, %s49
      %p51 = scmp.eq.s32.totalorder %s25, 0
      %p52 = por %p50, %p51
      %s54 = sadd.s32 %s53, 1
      %p57 = scmp.eq.s32.totalorder %s19, 1
      %p58 = scmp.ne.s32.totalorder %s53, %s55
      %p59 = scmp.eq.s32.totalorder %s19, 0
      %p60 = por %p58, %p59
      %p61 = scmp.ne.s32.totalorder %s53, %s55
      %p62 = scmp.eq.s32.totalorder %s24, 1
      %p63 = por %p61, %p62
      %p64 = scmp.ne.s32.totalorder %s55, %s56
      %p65 = scmp.eq.s32.totalorder %s24, 0
      %p66 = por %p64, %p65
      %p67 = scmp.ne.s32.totalorder %s55, %s56
      %p68 = scmp.eq.s32.totalorder %s25, 1
      %p69 = por %p67, %p68
      %p71 = scmp.ne.s32.totalorder %s56, %s70
      %p72 = scmp.eq.s32.totalorder %s25, 0
      %p73 = por %p71, %p72
      %s75 = sadd.s32 %s74, 1
      %p78 = scmp.eq.s32.totalorder %s19, 1
      %p79 = scmp.ne.s32.totalorder %s74, %s76
      %p80 = scmp.eq.s32.totalorder %s19, 0
      %p81 = por %p79, %p80
      %p82 = scmp.ne.s32.totalorder %s74, %s76
      %p83 = scmp.eq.s32.totalorder %s24, 1
      %p84 = por %p82, %p83
      %p85 = scmp.ne.s32.totalorder %s76, %s77
      %p86 = scmp.eq.s32.totalorder %s24, 0
      %p87 = por %p85, %p86
      %p88 = scmp.ne.s32.totalorder %s76, %s77
      %p89 = scmp.eq.s32.totalorder %s25, 1
      %p90 = por %p88, %p89
      %p92 = scmp.ne.s32.totalorder %s77, %s91
      %p93 = scmp.eq.s32.totalorder %s25, 0
      %p94 = por %p92, %p93
      %s96 = sadd.s32 %s95, 1
      %p99 = scmp.eq.s32.totalorder %s19, 1
      %p100 = scmp.ne.s32.totalorder %s95, %s97
      %p101 = scmp.eq.s32.totalorder %s19, 0
      %p102 = por %p100, %p101
      %p103 = scmp.ne.s32.totalorder %s95, %s97
      %p104 = scmp.eq.s32.totalorder %s24, 1
      %p105 = por %p103, %p104
      %p106 = scmp.ne.s32.totalorder %s97, %s98
      %p107 = scmp.eq.s32.totalorder %s24, 0
      %p108 = por %p106, %p107
      %p109 = scmp.ne.s32.totalorder %s97, %s98
      %p110 = scmp.eq.s32.totalorder %s25, 1
      %p111 = por %p109, %p110
      %p113 = scmp.ne.s32.totalorder %s98, %s112
      %p114 = scmp.eq.s32.totalorder %s25, 0
      %p115 = por %p113, %p114
      %s117 = sadd.s32 %s116, 1
      %p120 = scmp.eq.s32.totalorder %s19, 1
      %p121 = scmp.ne.s32.totalorder %s116, %s118
      %p122 = scmp.eq.s32.totalorder %s19, 0
      %p123 = por %p121, %p122
      %p124 = scmp.ne.s32.totalorder %s116, %s118
      %p125 = scmp.eq.s32.totalorder %s24, 1
      %p126 = por %p124, %p125
      %p127 = scmp.ne.s32.totalorder %s118, %s119
      %p128 = scmp.eq.s32.totalorder %s24, 0
      %p129 = por %p127, %p128
      %p130 = scmp.ne.s32.totalorder %s118, %s119
      %p131 = scmp.eq.s32.totalorder %s25, 1
      %p132 = por %p130, %p131
      %p134 = scmp.ne.s32.totalorder %s119, %s133
      %p135 = scmp.eq.s32.totalorder %s25, 0
      %p136 = por %p134, %p135
      %s138 = sadd.s32 %s137, 1
      %p141 = scmp.eq.s32.totalorder %s19, 1
      %p142 = scmp.ne.s32.totalorder %s137, %s139
      %p143 = scmp.eq.s32.totalorder %s19, 0
      %p144 = por %p142, %p143
      %p145 = scmp.ne.s32.totalorder %s137, %s139
      %p146 = scmp.eq.s32.totalorder %s24, 1
      %p147 = por %p145, %p146
      %p148 = scmp.ne.s32.totalorder %s139, %s140
      %p149 = scmp.eq.s32.totalorder %s24, 0
      %p150 = por %p148, %p149
      %p151 = scmp.ne.s32.totalorder %s139, %s140
      %p152 = scmp.eq.s32.totalorder %s25, 1
      %p153 = por %p151, %p152
      %p155 = scmp.ne.s32.totalorder %s140, %s154
      %p156 = scmp.eq.s32.totalorder %s25, 0
      %p157 = por %p155, %p156
      %s159 = sadd.s32 %s158, 1
      %p162 = scmp.eq.s32.totalorder %s19, 1
      %p163 = scmp.ne.s32.totalorder %s158, %s160
      %p164 = scmp.eq.s32.totalorder %s19, 0
      %p165 = por %p163, %p164
      %p166 = scmp.ne.s32.totalorder %s158, %s160
      %p167 = scmp.eq.s32.totalorder %s24, 1
      %p168 = por %p166, %p167
      %p169 = scmp.ne.s32.totalorder %s160, %s161
      %p170 = scmp.eq.s32.totalorder %s24, 0
      %p171 = por %p169, %p170
      %p172 = scmp.ne.s32.totalorder %s160, %s161
      %p173 = scmp.eq.s32.totalorder %s25, 1
      %p174 = por %p172, %p173
      %p176 = scmp.ne.s32.totalorder %s161, %s175
      %p177 = scmp.eq.s32.totalorder %s25, 0
      %p178 = por %p176, %p177
      %s180 = sadd.s32 %s179, 1
      %p183 = scmp.eq.s32.totalorder %s19, 1
      %p184 = scmp.ne.s32.totalorder %s179, %s181
      %p185 = scmp.eq.s32.totalorder %s19, 0
      %p186 = por %p184, %p185
      %p187 = scmp.ne.s32.totalorder %s179, %s181
      %p188 = scmp.eq.s32.totalorder %s24, 1
      %p189 = por %p187, %p188
      %p190 = scmp.ne.s32.totalorder %s181, %s182
      %p191 = scmp.eq.s32.totalorder %s24, 0
      %p192 = por %p190, %p191
      %p193 = scmp.ne.s32.totalorder %s181, %s182
      %p194 = scmp.eq.s32.totalorder %s25, 1
      %p195 = por %p193, %p194
      %p197 = scmp.ne.s32.totalorder %s182, %s196
      %p198 = scmp.eq.s32.totalorder %s25, 0
      %p199 = por %p197, %p198
      %s201 = sadd.s32 %s200, 1
      %p204 = scmp.eq.s32.totalorder %s19, 1
      %p205 = scmp.ne.s32.totalorder %s200, %s202
      %p206 = scmp.eq.s32.totalorder %s19, 0
      %p207 = por %p205, %p206
      %p208 = scmp.ne.s32.totalorder %s200, %s202
      %p209 = scmp.eq.s32.totalorder %s24, 1
      %p210 = por %p208, %p209
      %p211 = scmp.ne.s32.totalorder %s202, %s203
      %p212 = scmp.eq.s32.totalorder %s24, 0
      %p213 = por %p211, %p212
      %p214 = scmp.ne.s32.totalorder %s202, %s203
      %p215 = scmp.eq.s32.totalorder %s25, 1
      %p216 = por %p214, %p215
      %p218 = scmp.ne.s32.totalorder %s203, %s217
      %p219 = scmp.eq.s32.totalorder %s25, 0
      %p220 = por %p218, %p219
      %s222 = sadd.s32 %s221, 1
      %p225 = scmp.eq.s32.totalorder %s19, 1
      %p226 = scmp.ne.s32.totalorder %s221, %s223
      %p227 = scmp.eq.s32.totalorder %s19, 0
      %p228 = por %p226, %p227
      %p229 = scmp.ne.s32.totalorder %s221, %s223
      %p230 = scmp.eq.s32.totalorder %s24, 1
      %p231 = por %p229, %p230
      %p232 = scmp.ne.s32.totalorder %s223, %s224
      %p233 = scmp.eq.s32.totalorder %s24, 0
      %p234 = por %p232, %p233
      %p235 = scmp.ne.s32.totalorder %s223, %s224
      %p236 = scmp.eq.s32.totalorder %s25, 1
      %p237 = por %p235, %p236
      %p239 = scmp.ne.s32.totalorder %s224, %s238
      %p240 = scmp.eq.s32.totalorder %s25, 0
      %p241 = por %p239, %p240
      %s242 = ssub.s32 %s19, %s26
      %p243 = scmp.eq.s32.totalorder %s242, 0
      %s245 = sadd.s32 %s244, 1
      %s246 = scalar_select %p243, %s244, %s245
      %p249 = pneg %p243
      %p250 = scmp.eq.s32.totalorder %s19, 1
      %p251 = por %p249, %p250
      %p252 = scmp.ne.s32.totalorder %s244, %s247
      %p253 = scmp.eq.s32.totalorder %s19, 0
      %p254 = por %p252, %p253
      %p255 = scmp.ne.s32.totalorder %s244, %s247
      %p256 = scmp.eq.s32.totalorder %s24, 1
      %p257 = por %p255, %p256
      %p258 = scmp.ne.s32.totalorder %s247, %s248
      %p259 = scmp.eq.s32.totalorder %s24, 0
      %p260 = por %p258, %p259
      %p261 = scmp.ne.s32.totalorder %s247, %s248
      %p262 = scmp.eq.s32.totalorder %s25, 1
      %p263 = por %p261, %p262
      %p265 = scmp.ne.s32.totalorder %s248, %s264
      %p266 = scmp.eq.s32.totalorder %s25, 0
      %p267 = por %p265, %p266
      %p268 = scmp.le.s32.totalorder 1, %s19
      %p269 = scmp.lt.s32.totalorder %s19, 3
      %p270 = pnand %p268, %p269
      %p271 = pneg %p270
      // Predicated region
      $region9: #{tpu_custom_call.1} parent=5 // pred_check
        _
      $region10: #{tpu_custom_call.1} parent=5 // pred_check_branch
        %273 = sbr.rel (%p270) target = $region12
      $region11: #{tpu_custom_call.1} parent=5 // pred_region
        %s274 = ssub.s32 %s19, 1
        // Predicated region
        $region13: #{tpu_custom_call.1} parent=11 // pred_check
          %p275 = pneg %p66
        $region14: #{tpu_custom_call.1} parent=11 // pred_check_branch
          %277 = sbr.rel (%p275) target = $region16
        $region15: #{tpu_custom_call.1} parent=11 // pred_region
          _
        $region16: #{tpu_custom_call.1} parent=11 // pred_fallthru
          _
        // Predicated region
        $region17: #{tpu_custom_call.1} parent=11 // pred_check
          %p278 = pneg %p87
        $region18: #{tpu_custom_call.1} parent=11 // pred_check_branch
          %280 = sbr.rel (%p278) target = $region20
        $region19: #{tpu_custom_call.1} parent=11 // pred_region
          _
        $region20: #{tpu_custom_call.1} parent=11 // pred_fallthru
          _
        // Predicated region
        $region21: #{tpu_custom_call.1} parent=11 // pred_check
          %p281 = pneg %p108
        $region22: #{tpu_custom_call.1} parent=11 // pred_check_branch
          %283 = sbr.rel (%p281) target = $region24
        $region23: #{tpu_custom_call.1} parent=11 // pred_region
          _
        $region24: #{tpu_custom_call.1} parent=11 // pred_fallthru
          _
        // Predicated region
        $region25: #{tpu_custom_call.1} parent=11 // pred_check
          %p284 = pneg %p129
        $region26: #{tpu_custom_call.1} parent=11 // pred_check_branch
          %286 = sbr.rel (%p284) target = $region28
        $region27: #{tpu_custom_call.1} parent=11 // pred_region
          _
        $region28: #{tpu_custom_call.1} parent=11 // pred_fallthru
          _
        // Predicated region
        $region29: #{tpu_custom_call.1} parent=11 // pred_check
          %p287 = pneg %p150
        $region30: #{tpu_custom_call.1} parent=11 // pred_check_branch
          %289 = sbr.rel (%p287) target = $region32
        $region31: #{tpu_custom_call.1} parent=11 // pred_region
          _
        $region32: #{tpu_custom_call.1} parent=11 // pred_fallthru
          _
        // Predicated region
        $region33: #{tpu_custom_call.1} parent=11 // pred_check
          %p290 = pneg %p171
        $region34: #{tpu_custom_call.1} parent=11 // pred_check_branch
          %292 = sbr.rel (%p290) target = $region36
        $region35: #{tpu_custom_call.1} parent=11 // pred_region
          _
        $region36: #{tpu_custom_call.1} parent=11 // pred_fallthru
          _
        // Predicated region
        $region37: #{tpu_custom_call.1} parent=11 // pred_check
          %p293 = pneg %p192
        $region38: #{tpu_custom_call.1} parent=11 // pred_check_branch
          %295 = sbr.rel (%p293) target = $region40
        $region39: #{tpu_custom_call.1} parent=11 // pred_region
          _
        $region40: #{tpu_custom_call.1} parent=11 // pred_fallthru
          _
        // Predicated region
        $region41: #{tpu_custom_call.1} parent=11 // pred_check
          %p296 = pneg %p213
        $region42: #{tpu_custom_call.1} parent=11 // pred_check_branch
          %298 = sbr.rel (%p296) target = $region44
        $region43: #{tpu_custom_call.1} parent=11 // pred_region
          _
        $region44: #{tpu_custom_call.1} parent=11 // pred_fallthru
          _
        // Predicated region
        $region45: #{tpu_custom_call.1} parent=11 // pred_check
          %p299 = pneg %p234
        $region46: #{tpu_custom_call.1} parent=11 // pred_check_branch
          %301 = sbr.rel (%p299) target = $region48
        $region47: #{tpu_custom_call.1} parent=11 // pred_region
          _
        $region48: #{tpu_custom_call.1} parent=11 // pred_fallthru
          _
      $region12: #{tpu_custom_call.1} parent=5 // pred_fallthru
        _
      %p302 = scmp.lt.s32.totalorder %s19, 2
      // Predicated region
      $region49: #{tpu_custom_call.1} parent=5 // pred_check
        %p303 = pneg %p302
      $region50: #{tpu_custom_call.1} parent=5 // pred_check_branch
        %305 = sbr.rel (%p303) target = $region52
      $region51: #{tpu_custom_call.1} parent=5 // pred_region
        // Predicated region
        $region53: #{tpu_custom_call.1} parent=51 // pred_check
          %p306 = pneg %p39
        $region54: #{tpu_custom_call.1} parent=51 // pred_check_branch
          %308 = sbr.rel (%p306) target = $region56
        $region55: #{tpu_custom_call.1} parent=51 // pred_region
          %p309 = scmp.lt.s32.totalorder %s19, 1
          %s310 = scalar_select %p309, %s19, 1
          %s311 = smul.addr %s310, 54
          %s312 = smul.addr %s311, 4
          %s313 = scalar_lea.vmem %s0, %s312
        $region56: #{tpu_custom_call.1} parent=51 // pred_fallthru
          _
      $region52: #{tpu_custom_call.1} parent=5 // pred_fallthru
        _
      %p314 = scmp.le.s32.totalorder 1, %s19
      %p315 = scmp.lt.s32.totalorder %s19, 3
      %p316 = pnand %p314, %p315
      %p317 = pneg %p316
      // Predicated region
      $region57: #{tpu_custom_call.1} parent=5 // pred_check
        _
      $region58: #{tpu_custom_call.1} parent=5 // pred_check_branch
        %319 = sbr.rel (%p316) target = $region60
      $region59: #{tpu_custom_call.1} parent=5 // pred_region
        %s320 = ssub.s32 %s19, 1
        %p321 = scmp.lt.s32.totalorder %s24, 1
        %s322 = scalar_select %p321, %s24, 1
        %s323 = smul.addr %s322, 54
        %s324 = smul.addr %s323, 4
        %s325 = scalar_lea.vmem %s0, %s324
        %p326 = pneg %p45
        %p327 = pneg %p42
        %p328 = pneg %p66
        %p329 = pneg %p63
        %p330 = pneg %p87
        %p331 = pneg %p84
        %p332 = pneg %p108
        %p333 = pneg %p105
        %p334 = pneg %p129
        %p335 = pneg %p126
        %p336 = pneg %p150
        %p337 = pneg %p147
        %p338 = pneg %p171
        %p339 = pneg %p168
        %p340 = pneg %p192
        %p341 = pneg %p189
        %p342 = pneg %p213
        %p343 = pneg %p210
        %p344 = pneg %p234
        %p345 = pneg %p231
        %p346 = pneg %p260
        %p347 = pneg %p257
        %s348 = sand.u32 %s247, 1
        %s349 = scalar_lea.sflag [#allocation3], %s348
        %s350 = sand.u32 %s247, 1
        %s351 = smul.addr %s350, 128
        %s352 = scalar_lea.vmem [#allocation2], %s351
        %p353 = scmp.lt.s32.totalorder %s24, 1
        %s354 = scalar_select %p353, %s24, 1
        %s355 = smul.addr %s354, 54
        %s356 = smul.addr %s355, 4
        %s357 = scalar_lea.vmem %s0, %s356
        %v359 = vld [vmem:[%s357] sm:$0xf]
        %v360 = vld [vmem:[%s357 + $0x4] sm:$0xf]
        %v361 = vld [vmem:[%s357 + $0x8] sm:$0xf]
        %v362 = vld [vmem:[%s357 + $0xc] sm:$0xf]
        %v363 = vld [vmem:[%s357 + $0x10] sm:$0xf]
        %v364 = vld [vmem:[%s357 + $0x14] sm:$0xf]
        %v365 = vld [vmem:[%s357 + $0x18] sm:$0xf]
        %v366 = vld [vmem:[%s357 + $0x1c] sm:$0xf]
        %v367 = vld [vmem:[%s357 + $0x20] sm:$0xf]
        %v368 = vld [vmem:[%s357 + $0x24] sm:$0xf]
        %v369 = vld [vmem:[%s357 + $0x28] sm:$0xf]
        %v370 = vld [vmem:[%s357 + $0x2c] sm:$0xf]
        %v371 = vld [vmem:[%s357 + $0x30] sm:$0xf]
        %v372 = vld [vmem:[%s357 + $0x34] sm:$0xf]
        %v373 = vld [vmem:[%s357 + $0x38] sm:$0xf]
        %v374 = vld [vmem:[%s357 + $0x3c] sm:$0xf]
        %v375 = vld [vmem:[%s357 + $0x40] sm:$0xf]
        %v376 = vld [vmem:[%s357 + $0x44] sm:$0xf]
        %v377 = vld [vmem:[%s357 + $0x48] sm:$0xf]
        %v378 = vld [vmem:[%s357 + $0x4c] sm:$0xf]
        %v379 = vld [vmem:[%s357 + $0x50] sm:$0xf]
        %v380 = vld [vmem:[%s357 + $0x54] sm:$0xf]
        %v381 = vld [vmem:[%s357 + $0x58] sm:$0xf]
        %v382 = vld [vmem:[%s357 + $0x5c] sm:$0xf]
        %v383 = vld [vmem:[%s357 + $0x60] sm:$0xf]
        %v384 = vld [vmem:[%s357 + $0x64] sm:$0xf]
        %v385 = vld [vmem:[%s357 + $0x68] sm:$0xf]
        %v386 = vld [vmem:[%s357 + $0x6c] sm:$0xf]
        %v387 = vld [vmem:[%s357 + $0x70] sm:$0xf]
        %v388 = vld [vmem:[%s357 + $0x74] sm:$0xf]
        %v389 = vld [vmem:[%s357 + $0x78] sm:$0xf]
        %v390 = vld [vmem:[%s357 + $0x7c] sm:$0xf]
        %v391 = vld [vmem:[%s357 + $0x80] sm:$0xf]
        %v392 = vld [vmem:[%s357 + $0x84] sm:$0xf]
        %v393 = vld [vmem:[%s357 + $0x88] sm:$0xf]
        %v394 = vld [vmem:[%s357 + $0x8c] sm:$0xf]
        %v395 = vld [vmem:[%s357 + $0x90] sm:$0xf]
        %v396 = vld [vmem:[%s357 + $0x94] sm:$0xf]
        %v397 = vld [vmem:[%s357 + $0x98] sm:$0xf]
        %v398 = vld [vmem:[%s357 + $0x9c] sm:$0xf]
        %v399 = vld [vmem:[%s357 + $0xa0] sm:$0xf]
        %v400 = vld [vmem:[%s357 + $0xa4] sm:$0xf]
        %v401 = vld [vmem:[%s357 + $0xa8] sm:$0xf]
        %v402 = vld [vmem:[%s357 + $0xac] sm:$0xf]
        %v403 = vld [vmem:[%s357 + $0xb0] sm:$0xf]
        %v404 = vld [vmem:[%s357 + $0xb4] sm:$0xf]
        %v405 = vld [vmem:[%s357 + $0xb8] sm:$0xf]
        %v406 = vld [vmem:[%s357 + $0xbc] sm:$0xf]
        %v407 = vld [vmem:[%s357 + $0xc0] sm:$0xf]
        %v408 = vld [vmem:[%s357 + $0xc4] sm:$0xf]
        %v409 = vld [vmem:[%s357 + $0xc8] sm:$0xf]
        %v410 = vld [vmem:[%s357 + $0xcc] sm:$0xf]
        %v411 = vld [vmem:[%s357 + $0xd0] sm:$0xf]
        %v412 = vld [vmem:[%s357 + $0xd4] sm:$0xf]
        %v413 = vld [vmem:[%s1] sm:$0xf]
        %v414 = vld [vmem:[%s1 + $0x4] sm:$0xf]
        %v415 = vld [vmem:[%s1 + $0x8] sm:$0xf]
        %v416 = vld [vmem:[%s1 + $0xc] sm:$0xf]
        %v417 = vld [vmem:[%s1 + $0x10] sm:$0xf]
        %v418 = vld [vmem:[%s1 + $0x14] sm:$0xf]
        %v419 = vld [vmem:[%s1 + $0x18] sm:$0xf]
        %v420 = vld [vmem:[%s1 + $0x1c] sm:$0xf]
        %v475 = vunpack.c.l.b16 %v359
        %v476 = vunpack.c.l.b16 %v360
        %v477 = vunpack.c.l.b16 %v361
        %v478 = vunpack.c.l.b16 %v362
        %v479 = vunpack.c.l.b16 %v363
        %v480 = vunpack.c.l.b16 %v364
        %v481 = vunpack.c.l.b16 %v365
        %v482 = vunpack.c.l.b16 %v366
        %v483 = vunpack.c.l.b16 %v367
        %v484 = vunpack.c.l.b16 %v368
        %v485 = vunpack.c.l.b16 %v369
        %v486 = vunpack.c.l.b16 %v370
        %v487 = vunpack.c.l.b16 %v371
        %v488 = vunpack.c.l.b16 %v372
        %v489 = vunpack.c.l.b16 %v373
        %v490 = vunpack.c.l.b16 %v374
        %v491 = vunpack.c.l.b16 %v375
        %v492 = vunpack.c.l.b16 %v376
        %v493 = vunpack.c.l.b16 %v377
        %v494 = vunpack.c.l.b16 %v378
        %v495 = vunpack.c.l.b16 %v379
        %v496 = vunpack.c.l.b16 %v380
        %v497 = vunpack.c.l.b16 %v381
        %v498 = vunpack.c.l.b16 %v382
        %v499 = vunpack.c.l.b16 %v383
        %v500 = vunpack.c.l.b16 %v384
        %v501 = vunpack.c.l.b16 %v385
        %v502 = vunpack.c.l.b16 %v386
        %v503 = vunpack.c.l.b16 %v387
        %v504 = vunpack.c.l.b16 %v388
        %v505 = vunpack.c.l.b16 %v389
        %v506 = vunpack.c.l.b16 %v390
        %v507 = vunpack.c.l.b16 %v391
        %v508 = vunpack.c.l.b16 %v392
        %v509 = vunpack.c.l.b16 %v393
        %v510 = vunpack.c.l.b16 %v394
        %v511 = vunpack.c.l.b16 %v395
        %v512 = vunpack.c.l.b16 %v396
        %v513 = vunpack.c.l.b16 %v397
        %v514 = vunpack.c.l.b16 %v398
        %v515 = vunpack.c.l.b16 %v399
        %v516 = vunpack.c.l.b16 %v400
        %v517 = vunpack.c.l.b16 %v401
        %v518 = vunpack.c.l.b16 %v402
        %v519 = vunpack.c.l.b16 %v403
        %v520 = vunpack.c.l.b16 %v404
        %v521 = vunpack.c.l.b16 %v405
        %v522 = vunpack.c.l.b16 %v406
        %v523 = vunpack.c.l.b16 %v407
        %v524 = vunpack.c.l.b16 %v408
        %v525 = vunpack.c.l.b16 %v409
        %v526 = vunpack.c.l.b16 %v410
        %v527 = vunpack.c.l.b16 %v411
        %v528 = vunpack.c.l.b16 %v412
        %v529 = vpack.c.b16 %v476, %v475
        %v530 = vpack.c.b16 %v478, %v477
        %v531 = vpack.c.b16 %v480, %v479
        %v532 = vpack.c.b16 %v482, %v481
        %v533 = vpack.c.b16 %v484, %v483
        %v534 = vpack.c.b16 %v486, %v485
        %v535 = vpack.c.b16 %v488, %v487
        %v536 = vpack.c.b16 %v490, %v489
        %v537 = vpack.c.b16 %v492, %v491
        %v538 = vpack.c.b16 %v494, %v493
        %v539 = vpack.c.b16 %v496, %v495
        %v540 = vpack.c.b16 %v498, %v497
        %v541 = vpack.c.b16 %v500, %v499
        %v542 = vpack.c.b16 %v502, %v501
        %v543 = vpack.c.b16 %v504, %v503
        %v544 = vpack.c.b16 %v506, %v505
        %v545 = vpack.c.b16 %v508, %v507
        %v546 = vpack.c.b16 %v510, %v509
        %v547 = vpack.c.b16 %v512, %v511
        %v548 = vpack.c.b16 %v514, %v513
        %v549 = vpack.c.b16 %v516, %v515
        %v550 = vpack.c.b16 %v518, %v517
        %v551 = vpack.c.b16 %v520, %v519
        %v552 = vpack.c.b16 %v522, %v521
        %v553 = vpack.c.b16 %v524, %v523
        %v554 = vpack.c.b16 %v526, %v525
        %v555 = vpack.c.b16 %v528, %v527
        %v564 = vunpack.c.l.b16 %v413
        %v565 = vunpack.c.l.b16 %v414
        %v566 = vunpack.c.l.b16 %v415
        %v567 = vunpack.c.l.b16 %v416
        %v568 = vunpack.c.l.b16 %v417
        %v569 = vunpack.c.l.b16 %v418
        %v570 = vunpack.c.l.b16 %v419
        %v571 = vunpack.c.l.b16 %v420
        %v572 = vpack.c.b16 %v565, %v564
        %v573 = vpack.c.b16 %v567, %v566
        %v574 = vpack.c.b16 %v569, %v568
        %v575 = vpack.c.b16 %v571, %v570
        %vm580 = vcmask 523264
        %v582 = vsel %vm580, %v529, 0
        %v585 = vsel %vm580, %v530, 0
        %v588 = vsel %vm580, %v531, 0
        %v591 = vsel %vm580, %v532, 0
        %v594 = vsel %vm580, %v533, 0
        %v597 = vsel %vm580, %v534, 0
        %v600 = vsel %vm580, %v535, 0
        %v603 = vsel %vm580, %v536, 0
        %v606 = vsel %vm580, %v537, 0
        %v609 = vsel %vm580, %v538, 0
        %v612 = vsel %vm580, %v539, 0
        %v615 = vsel %vm580, %v540, 0
        %v618 = vsel %vm580, %v541, 0
        %v621 = vsel %vm580, %v542, 0
        %v624 = vsel %vm580, %v543, 0
        %v627 = vsel %vm580, %v544, 0
        %v630 = vsel %vm580, %v545, 0
        %v633 = vsel %vm580, %v546, 0
        %v636 = vsel %vm580, %v547, 0
        %v639 = vsel %vm580, %v548, 0
        %v642 = vsel %vm580, %v549, 0
        %v645 = vsel %vm580, %v550, 0
        %v648 = vsel %vm580, %v551, 0
        %v651 = vsel %vm580, %v552, 0
        %v654 = vsel %vm580, %v553, 0
        %v657 = vsel %vm580, %v554, 0
        %v660 = vsel %vm580, %v555, 0
        %662 = vmatprep.subr.bf16.mxu0 0
        %663 = vmatpush1.bf16.msra.mxu0 %v572
        %664 = vmatprep.subr.bf16.mxu0 0
        %665 = vmatpush1.bf16.msra.mxu0 %v573
        %666 = vmatprep.subr.bf16.mxu0 0
        %667 = vmatpush1.bf16.msra.mxu0 %v574
        %668 = vmatprep.subr.bf16.mxu0 0
        %669 = vmatpush1.bf16.msra.mxu0 %v575
        %670 = vmatprep.subr.bf16.mxu0 0
        %671 = vmatpush1.bf16.msra.mxu0 0
        %672 = vmatprep.subr.bf16.mxu0 0
        %673 = vmatpush1.bf16.msra.mxu0 0
        %674 = vmatprep.subr.bf16.mxu0 0
        %675 = vmatpush1.bf16.msra.mxu0 0
        %676 = vmatprep.subr.bf16.mxu0 0
        %677 = vmatpush1.bf16.msra.mxu0 0
        %678 = vmatprep.subr.bf16.mxu0 0
        %679 = vmatpush1.bf16.msra.mxu0 0
        %680 = vmatprep.subr.bf16.mxu0 0
        %681 = vmatpush1.bf16.msra.mxu0 0
        %682 = vmatprep.subr.bf16.mxu0 0
        %683 = vmatpush1.bf16.msra.mxu0 0
        %684 = vmatprep.subr.bf16.mxu0 0
        %685 = vmatpush1.bf16.msra.mxu0 0
        %686 = vmatprep.subr.bf16.mxu0 0
        %687 = vmatpush1.bf16.msra.mxu0 0
        %688 = vmatprep.subr.bf16.mxu0 0
        %689 = vmatpush1.bf16.msra.mxu0 0
        %690 = vmatprep.subr.bf16.mxu0 0
        %691 = vmatpush1.bf16.msra.mxu0 0
        %692 = vmatprep.subr.bf16.mxu0 0
        %693 = vmatpush1.bf16.msra.mxu0 0
        %694 = vmatprep.mubr.bf16.mxu0 0
        %695 = vmatmul.mubr.bf16.gmra.mrb[0].mxu0 %v582
        %v696 = vpop.f32.mrb[0].mxu0
        %v697 = vadd.f32 0.0, %v696
        %v698 = vpop.f32.mrb[0].mxu0
        %v699 = vpop.f32.mrb[0].mxu0
        %v700 = vadd.f32 0.0, %v699
        %v701 = vpop.f32.mrb[0].mxu0
        %702 = vmatprep.mubr.bf16.mxu0 0
        %703 = vmatmul.mubr.bf16.gmra.mrb[0].mxu0 %v585
        %v704 = vpop.f32.mrb[0].mxu0
        %v705 = vadd.f32 0.0, %v704
        %v706 = vpop.f32.mrb[0].mxu0
        %v707 = vpop.f32.mrb[0].mxu0
        %v708 = vadd.f32 0.0, %v707
        %v709 = vpop.f32.mrb[0].mxu0
        %710 = vmatprep.mubr.bf16.mxu0 0
        %711 = vmatmul.mubr.bf16.gmra.mrb[0].mxu0 %v588
        %v712 = vpop.f32.mrb[0].mxu0
        %v713 = vadd.f32 0.0, %v712
        %v714 = vpop.f32.mrb[0].mxu0
        %v715 = vpop.f32.mrb[0].mxu0
        %v716 = vadd.f32 0.0, %v715
        %v717 = vpop.f32.mrb[0].mxu0
        %718 = vmatprep.mubr.bf16.mxu0 0
        %719 = vmatmul.mubr.bf16.gmra.mrb[0].mxu0 %v591
        %v720 = vpop.f32.mrb[0].mxu0
        %v721 = vadd.f32 0.0, %v720
        %v722 = vpop.f32.mrb[0].mxu0
        %v723 = vpop.f32.mrb[0].mxu0
        %v724 = vadd.f32 0.0, %v723
        %v725 = vpop.f32.mrb[0].mxu0
        %726 = vmatprep.mubr.bf16.mxu0 0
        %727 = vmatmul.mubr.bf16.gmra.mrb[0].mxu0 %v594
        %v728 = vpop.f32.mrb[0].mxu0
        %v729 = vadd.f32 0.0, %v728
        %v730 = vpop.f32.mrb[0].mxu0
        %v731 = vpop.f32.mrb[0].mxu0
        %v732 = vadd.f32 0.0, %v731
        %v733 = vpop.f32.mrb[0].mxu0
        %734 = vmatprep.mubr.bf16.mxu0 0
        %735 = vmatmul.mubr.bf16.gmra.mrb[0].mxu0 %v597
        %v736 = vpop.f32.mrb[0].mxu0
        %v737 = vadd.f32 0.0, %v736
        %v738 = vpop.f32.mrb[0].mxu0
        %v739 = vpop.f32.mrb[0].mxu0
        %v740 = vadd.f32 0.0, %v739
        %v741 = vpop.f32.mrb[0].mxu0
        %742 = vmatprep.mubr.bf16.mxu0 0
        %743 = vmatmul.mubr.bf16.gmra.mrb[0].mxu0 %v600
        %v744 = vpop.f32.mrb[0].mxu0
        %v745 = vadd.f32 0.0, %v744
        %v746 = vpop.f32.mrb[0].mxu0
        %v747 = vpop.f32.mrb[0].mxu0
        %v748 = vadd.f32 0.0, %v747
        %v749 = vpop.f32.mrb[0].mxu0
        %750 = vmatprep.mubr.bf16.mxu0 0
        %751 = vmatmul.mubr.bf16.gmra.mrb[0].mxu0 %v603
        %v752 = vpop.f32.mrb[0].mxu0
        %v753 = vadd.f32 0.0, %v752
        %v754 = vpop.f32.mrb[0].mxu0
        %v755 = vpop.f32.mrb[0].mxu0
        %v756 = vadd.f32 0.0, %v755
        %v757 = vpop.f32.mrb[0].mxu0
        %758 = vmatprep.mubr.bf16.mxu0 0
        %759 = vmatmul.mubr.bf16.gmra.mrb[0].mxu0 %v606
        %v760 = vpop.f32.mrb[0].mxu0
        %v761 = vadd.f32 0.0, %v760
        %v762 = vpop.f32.mrb[0].mxu0
        %v763 = vpop.f32.mrb[0].mxu0
        %v764 = vadd.f32 0.0, %v763
        %v765 = vpop.f32.mrb[0].mxu0
        %766 = vmatprep.mubr.bf16.mxu0 0
        %767 = vmatmul.mubr.bf16.gmra.mrb[0].mxu0 %v609
        %v768 = vpop.f32.mrb[0].mxu0
        %v769 = vadd.f32 0.0, %v768
        %v770 = vpop.f32.mrb[0].mxu0
        %v771 = vpop.f32.mrb[0].mxu0
        %v772 = vadd.f32 0.0, %v771
        %v773 = vpop.f32.mrb[0].mxu0
        %774 = vmatprep.mubr.bf16.mxu0 0
        %775 = vmatmul.mubr.bf16.gmra.mrb[0].mxu0 %v612
        %v776 = vpop.f32.mrb[0].mxu0
        %v777 = vadd.f32 0.0, %v776
        %v778 = vpop.f32.mrb[0].mxu0
        %v779 = vpop.f32.mrb[0].mxu0
        %v780 = vadd.f32 0.0, %v779
        %v781 = vpop.f32.mrb[0].mxu0
        %782 = vmatprep.mubr.bf16.mxu0 0
        %783 = vmatmul.mubr.bf16.gmra.mrb[0].mxu0 %v615
        %v784 = vpop.f32.mrb[0].mxu0
        %v785 = vadd.f32 0.0, %v784
        %v786 = vpop.f32.mrb[0].mxu0
        %v787 = vpop.f32.mrb[0].mxu0
        %v788 = vadd.f32 0.0, %v787
        %v789 = vpop.f32.mrb[0].mxu0
        %790 = vmatprep.mubr.bf16.mxu0 0
        %791 = vmatmul.mubr.bf16.gmra.mrb[0].mxu0 %v618
        %v792 = vpop.f32.mrb[0].mxu0
        %v793 = vadd.f32 0.0, %v792
        %v794 = vpop.f32.mrb[0].mxu0
        %v795 = vpop.f32.mrb[0].mxu0
        %v796 = vadd.f32 0.0, %v795
        %v797 = vpop.f32.mrb[0].mxu0
        %798 = vmatprep.mubr.bf16.mxu0 0
        %799 = vmatmul.mubr.bf16.gmra.mrb[0].mxu0 %v621
        %v800 = vpop.f32.mrb[0].mxu0
        %v801 = vadd.f32 0.0, %v800
        %v802 = vpop.f32.mrb[0].mxu0
        %v803 = vpop.f32.mrb[0].mxu0
        %v804 = vadd.f32 0.0, %v803
        %v805 = vpop.f32.mrb[0].mxu0
        %806 = vmatprep.mubr.bf16.mxu0 0
        %807 = vmatmul.mubr.bf16.gmra.mrb[0].mxu0 %v624
        %v808 = vpop.f32.mrb[0].mxu0
        %v809 = vadd.f32 0.0, %v808
        %v810 = vpop.f32.mrb[0].mxu0
        %v811 = vpop.f32.mrb[0].mxu0
        %v812 = vadd.f32 0.0, %v811
        %v813 = vpop.f32.mrb[0].mxu0
        %814 = vmatprep.mubr.bf16.mxu0 0
        %815 = vmatmul.mubr.bf16.gmra.mrb[0].mxu0 %v627
        %v816 = vpop.f32.mrb[0].mxu0
        %v817 = vadd.f32 0.0, %v816
        %v818 = vpop.f32.mrb[0].mxu0
        %v819 = vpop.f32.mrb[0].mxu0
        %v820 = vadd.f32 0.0, %v819
        %v821 = vpop.f32.mrb[0].mxu0
        %822 = vmatprep.mubr.bf16.mxu0 0
        %823 = vmatmul.mubr.bf16.gmra.mrb[0].mxu0 %v630
        %v824 = vpop.f32.mrb[0].mxu0
        %v825 = vadd.f32 0.0, %v824
        %v826 = vpop.f32.mrb[0].mxu0
        %v827 = vpop.f32.mrb[0].mxu0
        %v828 = vadd.f32 0.0, %v827
        %v829 = vpop.f32.mrb[0].mxu0
        %830 = vmatprep.mubr.bf16.mxu0 0
        %831 = vmatmul.mubr.bf16.gmra.mrb[0].mxu0 %v633
        %v832 = vpop.f32.mrb[0].mxu0
        %v833 = vadd.f32 0.0, %v832
        %v834 = vpop.f32.mrb[0].mxu0
        %v835 = vpop.f32.mrb[0].mxu0
        %v836 = vadd.f32 0.0, %v835
        %v837 = vpop.f32.mrb[0].mxu0
        %838 = vmatprep.mubr.bf16.mxu0 0
        %839 = vmatmul.mubr.bf16.gmra.mrb[0].mxu0 %v636
        %v840 = vpop.f32.mrb[0].mxu0
        %v841 = vadd.f32 0.0, %v840
        %v842 = vpop.f32.mrb[0].mxu0
        %v843 = vpop.f32.mrb[0].mxu0
        %v844 = vadd.f32 0.0, %v843
        %v845 = vpop.f32.mrb[0].mxu0
        %846 = vmatprep.mubr.bf16.mxu0 0
        %847 = vmatmul.mubr.bf16.gmra.mrb[0].mxu0 %v639
        %v848 = vpop.f32.mrb[0].mxu0
        %v849 = vadd.f32 0.0, %v848
        %v850 = vpop.f32.mrb[0].mxu0
        %v851 = vpop.f32.mrb[0].mxu0
        %v852 = vadd.f32 0.0, %v851
        %v853 = vpop.f32.mrb[0].mxu0
        %854 = vmatprep.mubr.bf16.mxu0 0
        %855 = vmatmul.mubr.bf16.gmra.mrb[0].mxu0 %v642
        %v856 = vpop.f32.mrb[0].mxu0
        %v857 = vadd.f32 0.0, %v856
        %v858 = vpop.f32.mrb[0].mxu0
        %v859 = vpop.f32.mrb[0].mxu0
        %v860 = vadd.f32 0.0, %v859
        %v861 = vpop.f32.mrb[0].mxu0
        %862 = vmatprep.mubr.bf16.mxu0 0
        %863 = vmatmul.mubr.bf16.gmra.mrb[0].mxu0 %v645
        %v864 = vpop.f32.mrb[0].mxu0
        %v865 = vadd.f32 0.0, %v864
        %v866 = vpop.f32.mrb[0].mxu0
        %v867 = vpop.f32.mrb[0].mxu0
        %v868 = vadd.f32 0.0, %v867
        %v869 = vpop.f32.mrb[0].mxu0
        %870 = vmatprep.mubr.bf16.mxu0 0
        %871 = vmatmul.mubr.bf16.gmra.mrb[0].mxu0 %v648
        %v872 = vpop.f32.mrb[0].mxu0
        %v873 = vadd.f32 0.0, %v872
        %v874 = vpop.f32.mrb[0].mxu0
        %v875 = vpop.f32.mrb[0].mxu0
        %v876 = vadd.f32 0.0, %v875
        %v877 = vpop.f32.mrb[0].mxu0
        %878 = vmatprep.mubr.bf16.mxu0 0
        %879 = vmatmul.mubr.bf16.gmra.mrb[0].mxu0 %v651
        %v880 = vpop.f32.mrb[0].mxu0
        %v881 = vadd.f32 0.0, %v880
        %v882 = vpop.f32.mrb[0].mxu0
        %v883 = vpop.f32.mrb[0].mxu0
        %v884 = vadd.f32 0.0, %v883
        %v885 = vpop.f32.mrb[0].mxu0
        %886 = vmatprep.mubr.bf16.mxu0 0
        %887 = vmatmul.mubr.bf16.gmra.mrb[0].mxu0 %v654
        %v888 = vpop.f32.mrb[0].mxu0
        %v889 = vadd.f32 0.0, %v888
        %v890 = vpop.f32.mrb[0].mxu0
        %v891 = vpop.f32.mrb[0].mxu0
        %v892 = vadd.f32 0.0, %v891
        %v893 = vpop.f32.mrb[0].mxu0
        %894 = vmatprep.mubr.bf16.mxu0 0
        %895 = vmatmul.mubr.bf16.gmra.mrb[0].mxu0 %v657
        %v896 = vpop.f32.mrb[0].mxu0
        %v897 = vadd.f32 0.0, %v896
        %v898 = vpop.f32.mrb[0].mxu0
        %v899 = vpop.f32.mrb[0].mxu0
        %v900 = vadd.f32 0.0, %v899
        %v901 = vpop.f32.mrb[0].mxu0
        %902 = vmatprep.mubr.bf16.mxu0 0
        %903 = vmatmul.mubr.bf16.gmra.mrb[0].mxu0 %v660
        %v904 = vpop.f32.mrb[0].mxu0
        %v905 = vadd.f32 0.0, %v904
        %v906 = vpop.f32.mrb[0].mxu0
        %v907 = vpop.f32.mrb[0].mxu0
        %v908 = vadd.f32 0.0, %v907
        %v909 = vpop.f32.mrb[0].mxu0
        %910 = vdwg.mxu0
        %v911 = vld [vmem:[%s2] sm:$0x1]
        %v913 = vlaneseq
        %v914 = vshrl.u32 %v913, 7
        %v915 = vsub.s32 0, %v914
        %v916 = vrot.slane %v911, %v915
        %v918 = vmul.f32 %v697, %v916
        %v919 = vmul.f32 %v700, %v916
        %v920 = vmul.f32 %v705, %v916
        %v921 = vmul.f32 %v708, %v916
        %v922 = vmul.f32 %v713, %v916
        %v923 = vmul.f32 %v716, %v916
        %v924 = vmul.f32 %v721, %v916
        %v925 = vmul.f32 %v724, %v916
        %v926 = vmul.f32 %v729, %v916
        %v927 = vmul.f32 %v732, %v916
        %v928 = vmul.f32 %v737, %v916
        %v929 = vmul.f32 %v740, %v916
        %v930 = vmul.f32 %v745, %v916
        %v931 = vmul.f32 %v748, %v916
        %v932 = vmul.f32 %v753, %v916
        %v933 = vmul.f32 %v756, %v916
        %v934 = vmul.f32 %v761, %v916
        %v935 = vmul.f32 %v764, %v916
        %v936 = vmul.f32 %v769, %v916
        %v937 = vmul.f32 %v772, %v916
        %v938 = vmul.f32 %v777, %v916
        %v939 = vmul.f32 %v780, %v916
        %v940 = vmul.f32 %v785, %v916
        %v941 = vmul.f32 %v788, %v916
        %v942 = vmul.f32 %v793, %v916
        %v943 = vmul.f32 %v796, %v916
        %v944 = vmul.f32 %v801, %v916
        %v945 = vmul.f32 %v804, %v916
        %v946 = vmul.f32 %v809, %v916
        %v947 = vmul.f32 %v812, %v916
        %v948 = vmul.f32 %v817, %v916
        %v949 = vmul.f32 %v820, %v916
        %v950 = vmul.f32 %v825, %v916
        %v951 = vmul.f32 %v828, %v916
        %v952 = vmul.f32 %v833, %v916
        %v953 = vmul.f32 %v836, %v916
        %v954 = vmul.f32 %v841, %v916
        %v955 = vmul.f32 %v844, %v916
        %v956 = vmul.f32 %v849, %v916
        %v957 = vmul.f32 %v852, %v916
        %v958 = vmul.f32 %v857, %v916
        %v959 = vmul.f32 %v860, %v916
        %v960 = vmul.f32 %v865, %v916
        %v961 = vmul.f32 %v868, %v916
        %v962 = vmul.f32 %v873, %v916
        %v963 = vmul.f32 %v876, %v916
        %v964 = vmul.f32 %v881, %v916
        %v965 = vmul.f32 %v884, %v916
        %v966 = vmul.f32 %v889, %v916
        %v967 = vmul.f32 %v892, %v916
        %v968 = vmul.f32 %v897, %v916
        %v969 = vmul.f32 %v900, %v916
        %v970 = vmul.f32 %v905, %v916
        %v971 = vmul.f32 %v908, %v916
        %v972 = vld [vmem:[%s3] sm:$0x1]
        %v974 = vlaneseq
        %v975 = vshrl.u32 %v974, 7
        %v976 = vsub.s32 0, %v975
        %v977 = vrot.slane %v972, %v976
        %v979 = vadd.f32 %v918, %v977
        %v980 = vadd.f32 %v919, %v977
        %v981 = vadd.f32 %v920, %v977
        %v982 = vadd.f32 %v921, %v977
        %v983 = vadd.f32 %v922, %v977
        %v984 = vadd.f32 %v923, %v977
        %v985 = vadd.f32 %v924, %v977
        %v986 = vadd.f32 %v925, %v977
        %v987 = vadd.f32 %v926, %v977
        %v988 = vadd.f32 %v927, %v977
        %v989 = vadd.f32 %v928, %v977
        %v990 = vadd.f32 %v929, %v977
        %v991 = vadd.f32 %v930, %v977
        %v992 = vadd.f32 %v931, %v977
        %v993 = vadd.f32 %v932, %v977
        %v994 = vadd.f32 %v933, %v977
        %v995 = vadd.f32 %v934, %v977
        %v996 = vadd.f32 %v935, %v977
        %v997 = vadd.f32 %v936, %v977
        %v998 = vadd.f32 %v937, %v977
        %v999 = vadd.f32 %v938, %v977
        %v1000 = vadd.f32 %v939, %v977
        %v1001 = vadd.f32 %v940, %v977
        %v1002 = vadd.f32 %v941, %v977
        %v1003 = vadd.f32 %v942, %v977
        %v1004 = vadd.f32 %v943, %v977
        %v1005 = vadd.f32 %v944, %v977
        %v1006 = vadd.f32 %v945, %v977
        %v1007 = vadd.f32 %v946, %v977
        %v1008 = vadd.f32 %v947, %v977
        %v1009 = vadd.f32 %v948, %v977
        %v1010 = vadd.f32 %v949, %v977
        %v1011 = vadd.f32 %v950, %v977
        %v1012 = vadd.f32 %v951, %v977
        %v1013 = vadd.f32 %v952, %v977
        %v1014 = vadd.f32 %v953, %v977
        %v1015 = vadd.f32 %v954, %v977
        %v1016 = vadd.f32 %v955, %v977
        %v1017 = vadd.f32 %v956, %v977
        %v1018 = vadd.f32 %v957, %v977
        %v1019 = vadd.f32 %v958, %v977
        %v1020 = vadd.f32 %v959, %v977
        %v1021 = vadd.f32 %v960, %v977
        %v1022 = vadd.f32 %v961, %v977
        %v1023 = vadd.f32 %v962, %v977
        %v1024 = vadd.f32 %v963, %v977
        %v1025 = vadd.f32 %v964, %v977
        %v1026 = vadd.f32 %v965, %v977
        %v1027 = vadd.f32 %v966, %v977
        %v1028 = vadd.f32 %v967, %v977
        %v1029 = vadd.f32 %v968, %v977
        %v1030 = vadd.f32 %v969, %v977
        %v1031 = vadd.f32 %v970, %v977
        %v1032 = vadd.f32 %v971, %v977
        %v1033 = vmax.f32 %v979, 0.0
        %v1034 = vmax.f32 %v980, 0.0
        %v1035 = vmax.f32 %v981, 0.0
        %v1036 = vmax.f32 %v982, 0.0
        %v1037 = vmax.f32 %v983, 0.0
        %v1038 = vmax.f32 %v984, 0.0
        %v1039 = vmax.f32 %v985, 0.0
        %v1040 = vmax.f32 %v986, 0.0
        %v1041 = vmax.f32 %v987, 0.0
        %v1042 = vmax.f32 %v988, 0.0
        %v1043 = vmax.f32 %v989, 0.0
        %v1044 = vmax.f32 %v990, 0.0
        %v1045 = vmax.f32 %v991, 0.0
        %v1046 = vmax.f32 %v992, 0.0
        %v1047 = vmax.f32 %v993, 0.0
        %v1048 = vmax.f32 %v994, 0.0
        %v1049 = vmax.f32 %v995, 0.0
        %v1050 = vmax.f32 %v996, 0.0
        %v1051 = vmax.f32 %v997, 0.0
        %v1052 = vmax.f32 %v998, 0.0
        %v1053 = vmax.f32 %v999, 0.0
        %v1054 = vmax.f32 %v1000, 0.0
        %v1055 = vmax.f32 %v1001, 0.0
        %v1056 = vmax.f32 %v1002, 0.0
        %v1057 = vmax.f32 %v1003, 0.0
        %v1058 = vmax.f32 %v1004, 0.0
        %v1059 = vmax.f32 %v1005, 0.0
        %v1060 = vmax.f32 %v1006, 0.0
        %v1061 = vmax.f32 %v1007, 0.0
        %v1062 = vmax.f32 %v1008, 0.0
        %v1063 = vmax.f32 %v1009, 0.0
        %v1064 = vmax.f32 %v1010, 0.0
        %v1065 = vmax.f32 %v1011, 0.0
        %v1066 = vmax.f32 %v1012, 0.0
        %v1067 = vmax.f32 %v1013, 0.0
        %v1068 = vmax.f32 %v1014, 0.0
        %v1069 = vmax.f32 %v1015, 0.0
        %v1070 = vmax.f32 %v1016, 0.0
        %v1071 = vmax.f32 %v1017, 0.0
        %v1072 = vmax.f32 %v1018, 0.0
        %v1073 = vmax.f32 %v1019, 0.0
        %v1074 = vmax.f32 %v1020, 0.0
        %v1075 = vmax.f32 %v1021, 0.0
        %v1076 = vmax.f32 %v1022, 0.0
        %v1077 = vmax.f32 %v1023, 0.0
        %v1078 = vmax.f32 %v1024, 0.0
        %v1079 = vmax.f32 %v1025, 0.0
        %v1080 = vmax.f32 %v1026, 0.0
        %v1081 = vmax.f32 %v1027, 0.0
        %v1082 = vmax.f32 %v1028, 0.0
        %v1083 = vmax.f32 %v1029, 0.0
        %v1084 = vmax.f32 %v1030, 0.0
        %v1085 = vmax.f32 %v1031, 0.0
        %v1086 = vmax.f32 %v1032, 0.0
        %v1087 = vmin.f32 %v1033, 6.0
        %v1088 = vmin.f32 %v1034, 6.0
        %v1089 = vmin.f32 %v1035, 6.0
        %v1090 = vmin.f32 %v1036, 6.0
        %v1091 = vmin.f32 %v1037, 6.0
        %v1092 = vmin.f32 %v1038, 6.0
        %v1093 = vmin.f32 %v1039, 6.0
        %v1094 = vmin.f32 %v1040, 6.0
        %v1095 = vmin.f32 %v1041, 6.0
        %v1096 = vmin.f32 %v1042, 6.0
        %v1097 = vmin.f32 %v1043, 6.0
        %v1098 = vmin.f32 %v1044, 6.0
        %v1099 = vmin.f32 %v1045, 6.0
        %v1100 = vmin.f32 %v1046, 6.0
        %v1101 = vmin.f32 %v1047, 6.0
        %v1102 = vmin.f32 %v1048, 6.0
        %v1103 = vmin.f32 %v1049, 6.0
        %v1104 = vmin.f32 %v1050, 6.0
        %v1105 = vmin.f32 %v1051, 6.0
        %v1106 = vmin.f32 %v1052, 6.0
        %v1107 = vmin.f32 %v1053, 6.0
        %v1108 = vmin.f32 %v1054, 6.0
        %v1109 = vmin.f32 %v1055, 6.0
        %v1110 = vmin.f32 %v1056, 6.0
        %v1111 = vmin.f32 %v1057, 6.0
        %v1112 = vmin.f32 %v1058, 6.0
        %v1113 = vmin.f32 %v1059, 6.0
        %v1114 = vmin.f32 %v1060, 6.0
        %v1115 = vmin.f32 %v1061, 6.0
        %v1116 = vmin.f32 %v1062, 6.0
        %v1117 = vmin.f32 %v1063, 6.0
        %v1118 = vmin.f32 %v1064, 6.0
        %v1119 = vmin.f32 %v1065, 6.0
        %v1120 = vmin.f32 %v1066, 6.0
        %v1121 = vmin.f32 %v1067, 6.0
        %v1122 = vmin.f32 %v1068, 6.0
        %v1123 = vmin.f32 %v1069, 6.0
        %v1124 = vmin.f32 %v1070, 6.0
        %v1125 = vmin.f32 %v1071, 6.0
        %v1126 = vmin.f32 %v1072, 6.0
        %v1127 = vmin.f32 %v1073, 6.0
        %v1128 = vmin.f32 %v1074, 6.0
        %v1129 = vmin.f32 %v1075, 6.0
        %v1130 = vmin.f32 %v1076, 6.0
        %v1131 = vmin.f32 %v1077, 6.0
        %v1132 = vmin.f32 %v1078, 6.0
        %v1133 = vmin.f32 %v1079, 6.0
        %v1134 = vmin.f32 %v1080, 6.0
        %v1135 = vmin.f32 %v1081, 6.0
        %v1136 = vmin.f32 %v1082, 6.0
        %v1137 = vmin.f32 %v1083, 6.0
        %v1138 = vmin.f32 %v1084, 6.0
        %v1139 = vmin.f32 %v1085, 6.0
        %v1140 = vmin.f32 %v1086, 6.0
        %v1141 = vld [vmem:[%s4] sm:$0x1]
        %v1143 = vlaneseq
        %v1144 = vshrl.u32 %v1143, 7
        %v1145 = vsub.s32 0, %v1144
        %v1146 = vrot.slane %v1141, %v1145
        %v1148 = vmul.f32 %v1087, %v1146
        %v1149 = vmul.f32 %v1088, %v1146
        %v1150 = vmul.f32 %v1090, %v1146
        %v1151 = vmul.f32 %v1091, %v1146
        %v1152 = vmul.f32 %v1093, %v1146
        %v1153 = vmul.f32 %v1094, %v1146
        %v1154 = vmul.f32 %v1096, %v1146
        %v1155 = vmul.f32 %v1097, %v1146
        %v1156 = vmul.f32 %v1099, %v1146
        %v1157 = vmul.f32 %v1100, %v1146
        %v1158 = vmul.f32 %v1102, %v1146
        %v1159 = vmul.f32 %v1103, %v1146
        %v1160 = vmul.f32 %v1105, %v1146
        %v1161 = vmul.f32 %v1106, %v1146
        %v1162 = vmul.f32 %v1108, %v1146
        %v1163 = vmul.f32 %v1109, %v1146
        %v1164 = vmul.f32 %v1111, %v1146
        %v1165 = vmul.f32 %v1112, %v1146
        %v1166 = vmul.f32 %v1114, %v1146
        %v1167 = vmul.f32 %v1115, %v1146
        %v1168 = vmul.f32 %v1117, %v1146
        %v1169 = vmul.f32 %v1118, %v1146
        %v1170 = vmul.f32 %v1120, %v1146
        %v1171 = vmul.f32 %v1121, %v1146
        %v1172 = vmul.f32 %v1123, %v1146
        %v1173 = vmul.f32 %v1124, %v1146
        %v1174 = vmul.f32 %v1126, %v1146
        %v1175 = vmul.f32 %v1127, %v1146
        %v1176 = vmul.f32 %v1129, %v1146
        %v1177 = vmul.f32 %v1130, %v1146
        %v1178 = vmul.f32 %v1132, %v1146
        %v1179 = vmul.f32 %v1133, %v1146
        %v1180 = vadd.f32 %v1148, 0.0
        %v1181 = vadd.f32 %v1149, 0.0
        %v1182 = vadd.f32 %v1150, 0.0
        %v1183 = vadd.f32 %v1151, 0.0
        %v1184 = vadd.f32 %v1152, 0.0
        %v1185 = vadd.f32 %v1153, 0.0
        %v1186 = vadd.f32 %v1154, 0.0
        %v1187 = vadd.f32 %v1155, 0.0
        %v1188 = vadd.f32 %v1156, 0.0
        %v1189 = vadd.f32 %v1157, 0.0
        %v1190 = vadd.f32 %v1158, 0.0
        %v1191 = vadd.f32 %v1159, 0.0
        %v1192 = vadd.f32 %v1160, 0.0
        %v1193 = vadd.f32 %v1161, 0.0
        %v1194 = vadd.f32 %v1162, 0.0
        %v1195 = vadd.f32 %v1163, 0.0
        %v1196 = vadd.f32 %v1164, 0.0
        %v1197 = vadd.f32 %v1165, 0.0
        %v1198 = vadd.f32 %v1166, 0.0
        %v1199 = vadd.f32 %v1167, 0.0
        %v1200 = vadd.f32 %v1168, 0.0
        %v1201 = vadd.f32 %v1169, 0.0
        %v1202 = vadd.f32 %v1170, 0.0
        %v1203 = vadd.f32 %v1171, 0.0
        %v1204 = vadd.f32 %v1172, 0.0
        %v1205 = vadd.f32 %v1173, 0.0
        %v1206 = vadd.f32 %v1174, 0.0
        %v1207 = vadd.f32 %v1175, 0.0
        %v1208 = vadd.f32 %v1176, 0.0
        %v1209 = vadd.f32 %v1177, 0.0
        %v1210 = vadd.f32 %v1178, 0.0
        %v1211 = vadd.f32 %v1179, 0.0
        %s1212 = scalar_lea.vmem %s4, 1
        %v1213 = vld [vmem:[%s1212] sm:$0x1]
        %v1215 = vlaneseq
        %v1216 = vshrl.u32 %v1215, 7
        %v1217 = vsub.s32 0, %v1216
        %v1218 = vrot.slane %v1213, %v1217
        %v1220 = vmul.f32 %v1087, %v1218
        %v1221 = vmul.f32 %v1088, %v1218
        %v1222 = vmul.f32 %v1089, %v1218
        %v1223 = vmul.f32 %v1090, %v1218
        %v1224 = vmul.f32 %v1091, %v1218
        %v1225 = vmul.f32 %v1092, %v1218
        %v1226 = vmul.f32 %v1093, %v1218
        %v1227 = vmul.f32 %v1094, %v1218
        %v1228 = vmul.f32 %v1095, %v1218
        %v1229 = vmul.f32 %v1096, %v1218
        %v1230 = vmul.f32 %v1097, %v1218
        %v1231 = vmul.f32 %v1098, %v1218
        %v1232 = vmul.f32 %v1099, %v1218
        %v1233 = vmul.f32 %v1100, %v1218
        %v1234 = vmul.f32 %v1101, %v1218
        %v1235 = vmul.f32 %v1102, %v1218
        %v1236 = vmul.f32 %v1103, %v1218
        %v1237 = vmul.f32 %v1104, %v1218
        %v1238 = vmul.f32 %v1105, %v1218
        %v1239 = vmul.f32 %v1106, %v1218
        %v1240 = vmul.f32 %v1107, %v1218
        %v1241 = vmul.f32 %v1108, %v1218
        %v1242 = vmul.f32 %v1109, %v1218
        %v1243 = vmul.f32 %v1110, %v1218
        %v1244 = vmul.f32 %v1111, %v1218
        %v1245 = vmul.f32 %v1112, %v1218
        %v1246 = vmul.f32 %v1113, %v1218
        %v1247 = vmul.f32 %v1114, %v1218
        %v1248 = vmul.f32 %v1115, %v1218
        %v1249 = vmul.f32 %v1116, %v1218
        %v1250 = vmul.f32 %v1117, %v1218
        %v1251 = vmul.f32 %v1118, %v1218
        %v1252 = vmul.f32 %v1119, %v1218
        %v1253 = vmul.f32 %v1120, %v1218
        %v1254 = vmul.f32 %v1121, %v1218
        %v1255 = vmul.f32 %v1122, %v1218
        %v1256 = vmul.f32 %v1123, %v1218
        %v1257 = vmul.f32 %v1124, %v1218
        %v1258 = vmul.f32 %v1125, %v1218
        %v1259 = vmul.f32 %v1126, %v1218
        %v1260 = vmul.f32 %v1127, %v1218
        %v1261 = vmul.f32 %v1128, %v1218
        %v1262 = vmul.f32 %v1129, %v1218
        %v1263 = vmul.f32 %v1130, %v1218
        %v1264 = vmul.f32 %v1131, %v1218
        %v1265 = vmul.f32 %v1132, %v1218
        %v1266 = vmul.f32 %v1133, %v1218
        %v1267 = vmul.f32 %v1134, %v1218
        %vm1316 = vcmask 1046528
        %v1317 = vrot.slane %v1220, 1
        %v1318 = vrot.slane %v1221, 1
        %v1319 = vsel %vm1316, %v1317, %v1318
        %v1320 = vrot.slane %v1222, 1
        %v1321 = vsel %vm1316, %v1318, %v1320
        %v1322 = vrot.slane %v1223, 1
        %v1323 = vrot.slane %v1224, 1
        %v1324 = vsel %vm1316, %v1322, %v1323
        %v1325 = vrot.slane %v1225, 1
        %v1326 = vsel %vm1316, %v1323, %v1325
        %v1327 = vrot.slane %v1226, 1
        %v1328 = vrot.slane %v1227, 1
        %v1329 = vsel %vm1316, %v1327, %v1328
        %v1330 = vrot.slane %v1228, 1
        %v1331 = vsel %vm1316, %v1328, %v1330
        %v1332 = vrot.slane %v1229, 1
        %v1333 = vrot.slane %v1230, 1
        %v1334 = vsel %vm1316, %v1332, %v1333
        %v1335 = vrot.slane %v1231, 1
        %v1336 = vsel %vm1316, %v1333, %v1335
        %v1337 = vrot.slane %v1232, 1
        %v1338 = vrot.slane %v1233, 1
        %v1339 = vsel %vm1316, %v1337, %v1338
        %v1340 = vrot.slane %v1234, 1
        %v1341 = vsel %vm1316, %v1338, %v1340
        %v1342 = vrot.slane %v1235, 1
        %v1343 = vrot.slane %v1236, 1
        %v1344 = vsel %vm1316, %v1342, %v1343
        %v1345 = vrot.slane %v1237, 1
        %v1346 = vsel %vm1316, %v1343, %v1345
        %v1347 = vrot.slane %v1238, 1
        %v1348 = vrot.slane %v1239, 1
        %v1349 = vsel %vm1316, %v1347, %v1348
        %v1350 = vrot.slane %v1240, 1
        %v1351 = vsel %vm1316, %v1348, %v1350
        %v1352 = vrot.slane %v1241, 1
        %v1353 = vrot.slane %v1242, 1
        %v1354 = vsel %vm1316, %v1352, %v1353
        %v1355 = vrot.slane %v1243, 1
        %v1356 = vsel %vm1316, %v1353, %v1355
        %v1357 = vrot.slane %v1244, 1
        %v1358 = vrot.slane %v1245, 1
        %v1359 = vsel %vm1316, %v1357, %v1358
        %v1360 = vrot.slane %v1246, 1
        %v1361 = vsel %vm1316, %v1358, %v1360
        %v1362 = vrot.slane %v1247, 1
        %v1363 = vrot.slane %v1248, 1
        %v1364 = vsel %vm1316, %v1362, %v1363
        %v1365 = vrot.slane %v1249, 1
        %v1366 = vsel %vm1316, %v1363, %v1365
        %v1367 = vrot.slane %v1250, 1
        %v1368 = vrot.slane %v1251, 1
        %v1369 = vsel %vm1316, %v1367, %v1368
        %v1370 = vrot.slane %v1252, 1
        %v1371 = vsel %vm1316, %v1368, %v1370
        %v1372 = vrot.slane %v1253, 1
        %v1373 = vrot.slane %v1254, 1
        %v1374 = vsel %vm1316, %v1372, %v1373
        %v1375 = vrot.slane %v1255, 1
        %v1376 = vsel %vm1316, %v1373, %v1375
        %v1377 = vrot.slane %v1256, 1
        %v1378 = vrot.slane %v1257, 1
        %v1379 = vsel %vm1316, %v1377, %v1378
        %v1380 = vrot.slane %v1258, 1
        %v1381 = vsel %vm1316, %v1378, %v1380
        %v1382 = vrot.slane %v1259, 1
        %v1383 = vrot.slane %v1260, 1
        %v1384 = vsel %vm1316, %v1382, %v1383
        %v1385 = vrot.slane %v1261, 1
        %v1386 = vsel %vm1316, %v1383, %v1385
        %v1387 = vrot.slane %v1262, 1
        %v1388 = vrot.slane %v1263, 1
        %v1389 = vsel %vm1316, %v1387, %v1388
        %v1390 = vrot.slane %v1264, 1
        %v1391 = vsel %vm1316, %v1388, %v1390
        %v1392 = vrot.slane %v1265, 1
        %v1393 = vrot.slane %v1266, 1
        %v1394 = vsel %vm1316, %v1392, %v1393
        %v1395 = vrot.slane %v1267, 1
        %v1396 = vsel %vm1316, %v1393, %v1395
        %v1429 = vadd.f32 %v1180, %v1319
        %v1430 = vadd.f32 %v1181, %v1321
        %v1431 = vadd.f32 %v1182, %v1324
        %v1432 = vadd.f32 %v1183, %v1326
        %v1433 = vadd.f32 %v1184, %v1329
        %v1434 = vadd.f32 %v1185, %v1331
        %v1435 = vadd.f32 %v1186, %v1334
        %v1436 = vadd.f32 %v1187, %v1336
        %v1437 = vadd.f32 %v1188, %v1339
        %v1438 = vadd.f32 %v1189, %v1341
        %v1439 = vadd.f32 %v1190, %v1344
        %v1440 = vadd.f32 %v1191, %v1346
        %v1441 = vadd.f32 %v1192, %v1349
        %v1442 = vadd.f32 %v1193, %v1351
        %v1443 = vadd.f32 %v1194, %v1354
        %v1444 = vadd.f32 %v1195, %v1356
        %v1445 = vadd.f32 %v1196, %v1359
        %v1446 = vadd.f32 %v1197, %v1361
        %v1447 = vadd.f32 %v1198, %v1364
        %v1448 = vadd.f32 %v1199, %v1366
        %v1449 = vadd.f32 %v1200, %v1369
        %v1450 = vadd.f32 %v1201, %v1371
        %v1451 = vadd.f32 %v1202, %v1374
        %v1452 = vadd.f32 %v1203, %v1376
        %v1453 = vadd.f32 %v1204, %v1379
        %v1454 = vadd.f32 %v1205, %v1381
        %v1455 = vadd.f32 %v1206, %v1384
        %v1456 = vadd.f32 %v1207, %v1386
        %v1457 = vadd.f32 %v1208, %v1389
        %v1458 = vadd.f32 %v1209, %v1391
        %v1459 = vadd.f32 %v1210, %v1394
        %v1460 = vadd.f32 %v1211, %v1396
        %s1461 = scalar_lea.vmem %s4, 2
        %v1462 = vld [vmem:[%s1461] sm:$0x1]
        %v1464 = vlaneseq
        %v1465 = vshrl.u32 %v1464, 7
        %v1466 = vsub.s32 0, %v1465
        %v1467 = vrot.slane %v1462, %v1466
        %v1469 = vmul.f32 %v1087, %v1467
        %v1470 = vmul.f32 %v1088, %v1467
        %v1471 = vmul.f32 %v1089, %v1467
        %v1472 = vmul.f32 %v1090, %v1467
        %v1473 = vmul.f32 %v1091, %v1467
        %v1474 = vmul.f32 %v1092, %v1467
        %v1475 = vmul.f32 %v1093, %v1467
        %v1476 = vmul.f32 %v1094, %v1467
        %v1477 = vmul.f32 %v1095, %v1467
        %v1478 = vmul.f32 %v1096, %v1467
        %v1479 = vmul.f32 %v1097, %v1467
        %v1480 = vmul.f32 %v1098, %v1467
        %v1481 = vmul.f32 %v1099, %v1467
        %v1482 = vmul.f32 %v1100, %v1467
        %v1483 = vmul.f32 %v1101, %v1467
        %v1484 = vmul.f32 %v1102, %v1467
        %v1485 = vmul.f32 %v1103, %v1467
        %v1486 = vmul.f32 %v1104, %v1467
        %v1487 = vmul.f32 %v1105, %v1467
        %v1488 = vmul.f32 %v1106, %v1467
        %v1489 = vmul.f32 %v1107, %v1467
        %v1490 = vmul.f32 %v1108, %v1467
        %v1491 = vmul.f32 %v1109, %v1467
        %v1492 = vmul.f32 %v1110, %v1467
        %v1493 = vmul.f32 %v1111, %v1467
        %v1494 = vmul.f32 %v1112, %v1467
        %v1495 = vmul.f32 %v1113, %v1467
        %v1496 = vmul.f32 %v1114, %v1467
        %v1497 = vmul.f32 %v1115, %v1467
        %v1498 = vmul.f32 %v1116, %v1467
        %v1499 = vmul.f32 %v1117, %v1467
        %v1500 = vmul.f32 %v1118, %v1467
        %v1501 = vmul.f32 %v1119, %v1467
        %v1502 = vmul.f32 %v1120, %v1467
        %v1503 = vmul.f32 %v1121, %v1467
        %v1504 = vmul.f32 %v1122, %v1467
        %v1505 = vmul.f32 %v1123, %v1467
        %v1506 = vmul.f32 %v1124, %v1467
        %v1507 = vmul.f32 %v1125, %v1467
        %v1508 = vmul.f32 %v1126, %v1467
        %v1509 = vmul.f32 %v1127, %v1467
        %v1510 = vmul.f32 %v1128, %v1467
        %v1511 = vmul.f32 %v1129, %v1467
        %v1512 = vmul.f32 %v1130, %v1467
        %v1513 = vmul.f32 %v1131, %v1467
        %v1514 = vmul.f32 %v1132, %v1467
        %v1515 = vmul.f32 %v1133, %v1467
        %v1516 = vmul.f32 %v1134, %v1467
        %vm1565 = vcmask 1045504
        %v1566 = vrot.slane %v1469, 2
        %v1567 = vrot.slane %v1470, 2
        %v1568 = vsel %vm1565, %v1566, %v1567
        %v1569 = vrot.slane %v1471, 2
        %v1570 = vsel %vm1565, %v1567, %v1569
        %v1571 = vrot.slane %v1472, 2
        %v1572 = vrot.slane %v1473, 2
        %v1573 = vsel %vm1565, %v1571, %v1572
        %v1574 = vrot.slane %v1474, 2
        %v1575 = vsel %vm1565, %v1572, %v1574
        %v1576 = vrot.slane %v1475, 2
        %v1577 = vrot.slane %v1476, 2
        %v1578 = vsel %vm1565, %v1576, %v1577
        %v1579 = vrot.slane %v1477, 2
        %v1580 = vsel %vm1565, %v1577, %v1579
        %v1581 = vrot.slane %v1478, 2
        %v1582 = vrot.slane %v1479, 2
        %v1583 = vsel %vm1565, %v1581, %v1582
        %v1584 = vrot.slane %v1480, 2
        %v1585 = vsel %vm1565, %v1582, %v1584
        %v1586 = vrot.slane %v1481, 2
        %v1587 = vrot.slane %v1482, 2
        %v1588 = vsel %vm1565, %v1586, %v1587
        %v1589 = vrot.slane %v1483, 2
        %v1590 = vsel %vm1565, %v1587, %v1589
        %v1591 = vrot.slane %v1484, 2
        %v1592 = vrot.slane %v1485, 2
        %v1593 = vsel %vm1565, %v1591, %v1592
        %v1594 = vrot.slane %v1486, 2
        %v1595 = vsel %vm1565, %v1592, %v1594
        %v1596 = vrot.slane %v1487, 2
        %v1597 = vrot.slane %v1488, 2
        %v1598 = vsel %vm1565, %v1596, %v1597
        %v1599 = vrot.slane %v1489, 2
        %v1600 = vsel %vm1565, %v1597, %v1599
        %v1601 = vrot.slane %v1490, 2
        %v1602 = vrot.slane %v1491, 2
        %v1603 = vsel %vm1565, %v1601, %v1602
        %v1604 = vrot.slane %v1492, 2
        %v1605 = vsel %vm1565, %v1602, %v1604
        %v1606 = vrot.slane %v1493, 2
        %v1607 = vrot.slane %v1494, 2
        %v1608 = vsel %vm1565, %v1606, %v1607
        %v1609 = vrot.slane %v1495, 2
        %v1610 = vsel %vm1565, %v1607, %v1609
        %v1611 = vrot.slane %v1496, 2
        %v1612 = vrot.slane %v1497, 2
        %v1613 = vsel %vm1565, %v1611, %v1612
        %v1614 = vrot.slane %v1498, 2
        %v1615 = vsel %vm1565, %v1612, %v1614
        %v1616 = vrot.slane %v1499, 2
        %v1617 = vrot.slane %v1500, 2
        %v1618 = vsel %vm1565, %v1616, %v1617
        %v1619 = vrot.slane %v1501, 2
        %v1620 = vsel %vm1565, %v1617, %v1619
        %v1621 = vrot.slane %v1502, 2
        %v1622 = vrot.slane %v1503, 2
        %v1623 = vsel %vm1565, %v1621, %v1622
        %v1624 = vrot.slane %v1504, 2
        %v1625 = vsel %vm1565, %v1622, %v1624
        %v1626 = vrot.slane %v1505, 2
        %v1627 = vrot.slane %v1506, 2
        %v1628 = vsel %vm1565, %v1626, %v1627
        %v1629 = vrot.slane %v1507, 2
        %v1630 = vsel %vm1565, %v1627, %v1629
        %v1631 = vrot.slane %v1508, 2
        %v1632 = vrot.slane %v1509, 2
        %v1633 = vsel %vm1565, %v1631, %v1632
        %v1634 = vrot.slane %v1510, 2
        %v1635 = vsel %vm1565, %v1632, %v1634
        %v1636 = vrot.slane %v1511, 2
        %v1637 = vrot.slane %v1512, 2
        %v1638 = vsel %vm1565, %v1636, %v1637
        %v1639 = vrot.slane %v1513, 2
        %v1640 = vsel %vm1565, %v1637, %v1639
        %v1641 = vrot.slane %v1514, 2
        %v1642 = vrot.slane %v1515, 2
        %v1643 = vsel %vm1565, %v1641, %v1642
        %v1644 = vrot.slane %v1516, 2
        %v1645 = vsel %vm1565, %v1642, %v1644
        %v1678 = vadd.f32 %v1429, %v1568
        %v1679 = vadd.f32 %v1430, %v1570
        %v1680 = vadd.f32 %v1431, %v1573
        %v1681 = vadd.f32 %v1432, %v1575
        %v1682 = vadd.f32 %v1433, %v1578
        %v1683 = vadd.f32 %v1434, %v1580
        %v1684 = vadd.f32 %v1435, %v1583
        %v1685 = vadd.f32 %v1436, %v1585
        %v1686 = vadd.f32 %v1437, %v1588
        %v1687 = vadd.f32 %v1438, %v1590
        %v1688 = vadd.f32 %v1439, %v1593
        %v1689 = vadd.f32 %v1440, %v1595
        %v1690 = vadd.f32 %v1441, %v1598
        %v1691 = vadd.f32 %v1442, %v1600
        %v1692 = vadd.f32 %v1443, %v1603
        %v1693 = vadd.f32 %v1444, %v1605
        %v1694 = vadd.f32 %v1445, %v1608
        %v1695 = vadd.f32 %v1446, %v1610
        %v1696 = vadd.f32 %v1447, %v1613
        %v1697 = vadd.f32 %v1448, %v1615
        %v1698 = vadd.f32 %v1449, %v1618
        %v1699 = vadd.f32 %v1450, %v1620
        %v1700 = vadd.f32 %v1451, %v1623
        %v1701 = vadd.f32 %v1452, %v1625
        %v1702 = vadd.f32 %v1453, %v1628
        %v1703 = vadd.f32 %v1454, %v1630
        %v1704 = vadd.f32 %v1455, %v1633
        %v1705 = vadd.f32 %v1456, %v1635
        %v1706 = vadd.f32 %v1457, %v1638
        %v1707 = vadd.f32 %v1458, %v1640
        %v1708 = vadd.f32 %v1459, %v1643
        %v1709 = vadd.f32 %v1460, %v1645
        %s1710 = scalar_lea.vmem %s4, 3
        %v1711 = vld [vmem:[%s1710] sm:$0x1]
        %v1713 = vlaneseq
        %v1714 = vshrl.u32 %v1713, 7
        %v1715 = vsub.s32 0, %v1714
        %v1716 = vrot.slane %v1711, %v1715
        %v1718 = vmul.f32 %v1090, %v1716
        %v1719 = vmul.f32 %v1091, %v1716
        %v1720 = vmul.f32 %v1093, %v1716
        %v1721 = vmul.f32 %v1094, %v1716
        %v1722 = vmul.f32 %v1096, %v1716
        %v1723 = vmul.f32 %v1097, %v1716
        %v1724 = vmul.f32 %v1099, %v1716
        %v1725 = vmul.f32 %v1100, %v1716
        %v1726 = vmul.f32 %v1102, %v1716
        %v1727 = vmul.f32 %v1103, %v1716
        %v1728 = vmul.f32 %v1105, %v1716
        %v1729 = vmul.f32 %v1106, %v1716
        %v1730 = vmul.f32 %v1108, %v1716
        %v1731 = vmul.f32 %v1109, %v1716
        %v1732 = vmul.f32 %v1111, %v1716
        %v1733 = vmul.f32 %v1112, %v1716
        %v1734 = vmul.f32 %v1114, %v1716
        %v1735 = vmul.f32 %v1115, %v1716
        %v1736 = vmul.f32 %v1117, %v1716
        %v1737 = vmul.f32 %v1118, %v1716
        %v1738 = vmul.f32 %v1120, %v1716
        %v1739 = vmul.f32 %v1121, %v1716
        %v1740 = vmul.f32 %v1123, %v1716
        %v1741 = vmul.f32 %v1124, %v1716
        %v1742 = vmul.f32 %v1126, %v1716
        %v1743 = vmul.f32 %v1127, %v1716
        %v1744 = vmul.f32 %v1129, %v1716
        %v1745 = vmul.f32 %v1130, %v1716
        %v1746 = vmul.f32 %v1132, %v1716
        %v1747 = vmul.f32 %v1133, %v1716
        %v1748 = vmul.f32 %v1135, %v1716
        %v1749 = vmul.f32 %v1136, %v1716
        %v1750 = vadd.f32 %v1678, %v1718
        %v1751 = vadd.f32 %v1679, %v1719
        %v1752 = vadd.f32 %v1680, %v1720
        %v1753 = vadd.f32 %v1681, %v1721
        %v1754 = vadd.f32 %v1682, %v1722
        %v1755 = vadd.f32 %v1683, %v1723
        %v1756 = vadd.f32 %v1684, %v1724
        %v1757 = vadd.f32 %v1685, %v1725
        %v1758 = vadd.f32 %v1686, %v1726
        %v1759 = vadd.f32 %v1687, %v1727
        %v1760 = vadd.f32 %v1688, %v1728
        %v1761 = vadd.f32 %v1689, %v1729
        %v1762 = vadd.f32 %v1690, %v1730
        %v1763 = vadd.f32 %v1691, %v1731
        %v1764 = vadd.f32 %v1692, %v1732
        %v1765 = vadd.f32 %v1693, %v1733
        %v1766 = vadd.f32 %v1694, %v1734
        %v1767 = vadd.f32 %v1695, %v1735
        %v1768 = vadd.f32 %v1696, %v1736
        %v1769 = vadd.f32 %v1697, %v1737
        %v1770 = vadd.f32 %v1698, %v1738
        %v1771 = vadd.f32 %v1699, %v1739
        %v1772 = vadd.f32 %v1700, %v1740
        %v1773 = vadd.f32 %v1701, %v1741
        %v1774 = vadd.f32 %v1702, %v1742
        %v1775 = vadd.f32 %v1703, %v1743
        %v1776 = vadd.f32 %v1704, %v1744
        %v1777 = vadd.f32 %v1705, %v1745
        %v1778 = vadd.f32 %v1706, %v1746
        %v1779 = vadd.f32 %v1707, %v1747
        %v1780 = vadd.f32 %v1708, %v1748
        %v1781 = vadd.f32 %v1709, %v1749
        %s1782 = scalar_lea.vmem %s4, 4
        %v1783 = vld [vmem:[%s1782] sm:$0x1]
        %v1785 = vlaneseq
        %v1786 = vshrl.u32 %v1785, 7
        %v1787 = vsub.s32 0, %v1786
        %v1788 = vrot.slane %v1783, %v1787
        %v1790 = vmul.f32 %v1090, %v1788
        %v1791 = vmul.f32 %v1091, %v1788
        %v1792 = vmul.f32 %v1092, %v1788
        %v1793 = vmul.f32 %v1093, %v1788
        %v1794 = vmul.f32 %v1094, %v1788
        %v1795 = vmul.f32 %v1095, %v1788
        %v1796 = vmul.f32 %v1096, %v1788
        %v1797 = vmul.f32 %v1097, %v1788
        %v1798 = vmul.f32 %v1098, %v1788
        %v1799 = vmul.f32 %v1099, %v1788
        %v1800 = vmul.f32 %v1100, %v1788
        %v1801 = vmul.f32 %v1101, %v1788
        %v1802 = vmul.f32 %v1102, %v1788
        %v1803 = vmul.f32 %v1103, %v1788
        %v1804 = vmul.f32 %v1104, %v1788
        %v1805 = vmul.f32 %v1105, %v1788
        %v1806 = vmul.f32 %v1106, %v1788
        %v1807 = vmul.f32 %v1107, %v1788
        %v1808 = vmul.f32 %v1108, %v1788
        %v1809 = vmul.f32 %v1109, %v1788
        %v1810 = vmul.f32 %v1110, %v1788
        %v1811 = vmul.f32 %v1111, %v1788
        %v1812 = vmul.f32 %v1112, %v1788
        %v1813 = vmul.f32 %v1113, %v1788
        %v1814 = vmul.f32 %v1114, %v1788
        %v1815 = vmul.f32 %v1115, %v1788
        %v1816 = vmul.f32 %v1116, %v1788
        %v1817 = vmul.f32 %v1117, %v1788
        %v1818 = vmul.f32 %v1118, %v1788
        %v1819 = vmul.f32 %v1119, %v1788
        %v1820 = vmul.f32 %v1120, %v1788
        %v1821 = vmul.f32 %v1121, %v1788
        %v1822 = vmul.f32 %v1122, %v1788
        %v1823 = vmul.f32 %v1123, %v1788
        %v1824 = vmul.f32 %v1124, %v1788
        %v1825 = vmul.f32 %v1125, %v1788
        %v1826 = vmul.f32 %v1126, %v1788
        %v1827 = vmul.f32 %v1127, %v1788
        %v1828 = vmul.f32 %v1128, %v1788
        %v1829 = vmul.f32 %v1129, %v1788
        %v1830 = vmul.f32 %v1130, %v1788
        %v1831 = vmul.f32 %v1131, %v1788
        %v1832 = vmul.f32 %v1132, %v1788
        %v1833 = vmul.f32 %v1133, %v1788
        %v1834 = vmul.f32 %v1134, %v1788
        %v1835 = vmul.f32 %v1135, %v1788
        %v1836 = vmul.f32 %v1136, %v1788
        %v1837 = vmul.f32 %v1137, %v1788
        %v1886 = vrot.slane %v1790, 1
        %v1887 = vrot.slane %v1791, 1
        %v1888 = vsel %vm1316, %v1886, %v1887
        %v1889 = vrot.slane %v1792, 1
        %v1890 = vsel %vm1316, %v1887, %v1889
        %v1891 = vrot.slane %v1793, 1
        %v1892 = vrot.slane %v1794, 1
        %v1893 = vsel %vm1316, %v1891, %v1892
        %v1894 = vrot.slane %v1795, 1
        %v1895 = vsel %vm1316, %v1892, %v1894
        %v1896 = vrot.slane %v1796, 1
        %v1897 = vrot.slane %v1797, 1
        %v1898 = vsel %vm1316, %v1896, %v1897
        %v1899 = vrot.slane %v1798, 1
        %v1900 = vsel %vm1316, %v1897, %v1899
        %v1901 = vrot.slane %v1799, 1
        %v1902 = vrot.slane %v1800, 1
        %v1903 = vsel %vm1316, %v1901, %v1902
        %v1904 = vrot.slane %v1801, 1
        %v1905 = vsel %vm1316, %v1902, %v1904
        %v1906 = vrot.slane %v1802, 1
        %v1907 = vrot.slane %v1803, 1
        %v1908 = vsel %vm1316, %v1906, %v1907
        %v1909 = vrot.slane %v1804, 1
        %v1910 = vsel %vm1316, %v1907, %v1909
        %v1911 = vrot.slane %v1805, 1
        %v1912 = vrot.slane %v1806, 1
        %v1913 = vsel %vm1316, %v1911, %v1912
        %v1914 = vrot.slane %v1807, 1
        %v1915 = vsel %vm1316, %v1912, %v1914
        %v1916 = vrot.slane %v1808, 1
        %v1917 = vrot.slane %v1809, 1
        %v1918 = vsel %vm1316, %v1916, %v1917
        %v1919 = vrot.slane %v1810, 1
        %v1920 = vsel %vm1316, %v1917, %v1919
        %v1921 = vrot.slane %v1811, 1
        %v1922 = vrot.slane %v1812, 1
        %v1923 = vsel %vm1316, %v1921, %v1922
        %v1924 = vrot.slane %v1813, 1
        %v1925 = vsel %vm1316, %v1922, %v1924
        %v1926 = vrot.slane %v1814, 1
        %v1927 = vrot.slane %v1815, 1
        %v1928 = vsel %vm1316, %v1926, %v1927
        %v1929 = vrot.slane %v1816, 1
        %v1930 = vsel %vm1316, %v1927, %v1929
        %v1931 = vrot.slane %v1817, 1
        %v1932 = vrot.slane %v1818, 1
        %v1933 = vsel %vm1316, %v1931, %v1932
        %v1934 = vrot.slane %v1819, 1
        %v1935 = vsel %vm1316, %v1932, %v1934
        %v1936 = vrot.slane %v1820, 1
        %v1937 = vrot.slane %v1821, 1
        %v1938 = vsel %vm1316, %v1936, %v1937
        %v1939 = vrot.slane %v1822, 1
        %v1940 = vsel %vm1316, %v1937, %v1939
        %v1941 = vrot.slane %v1823, 1
        %v1942 = vrot.slane %v1824, 1
        %v1943 = vsel %vm1316, %v1941, %v1942
        %v1944 = vrot.slane %v1825, 1
        %v1945 = vsel %vm1316, %v1942, %v1944
        %v1946 = vrot.slane %v1826, 1
        %v1947 = vrot.slane %v1827, 1
        %v1948 = vsel %vm1316, %v1946, %v1947
        %v1949 = vrot.slane %v1828, 1
        %v1950 = vsel %vm1316, %v1947, %v1949
        %v1951 = vrot.slane %v1829, 1
        %v1952 = vrot.slane %v1830, 1
        %v1953 = vsel %vm1316, %v1951, %v1952
        %v1954 = vrot.slane %v1831, 1
        %v1955 = vsel %vm1316, %v1952, %v1954
        %v1956 = vrot.slane %v1832, 1
        %v1957 = vrot.slane %v1833, 1
        %v1958 = vsel %vm1316, %v1956, %v1957
        %v1959 = vrot.slane %v1834, 1
        %v1960 = vsel %vm1316, %v1957, %v1959
        %v1961 = vrot.slane %v1835, 1
        %v1962 = vrot.slane %v1836, 1
        %v1963 = vsel %vm1316, %v1961, %v1962
        %v1964 = vrot.slane %v1837, 1
        %v1965 = vsel %vm1316, %v1962, %v1964
        %v1998 = vadd.f32 %v1750, %v1888
        %v1999 = vadd.f32 %v1751, %v1890
        %v2000 = vadd.f32 %v1752, %v1893
        %v2001 = vadd.f32 %v1753, %v1895
        %v2002 = vadd.f32 %v1754, %v1898
        %v2003 = vadd.f32 %v1755, %v1900
        %v2004 = vadd.f32 %v1756, %v1903
        %v2005 = vadd.f32 %v1757, %v1905
        %v2006 = vadd.f32 %v1758, %v1908
        %v2007 = vadd.f32 %v1759, %v1910
        %v2008 = vadd.f32 %v1760, %v1913
        %v2009 = vadd.f32 %v1761, %v1915
        %v2010 = vadd.f32 %v1762, %v1918
        %v2011 = vadd.f32 %v1763, %v1920
        %v2012 = vadd.f32 %v1764, %v1923
        %v2013 = vadd.f32 %v1765, %v1925
        %v2014 = vadd.f32 %v1766, %v1928
        %v2015 = vadd.f32 %v1767, %v1930
        %v2016 = vadd.f32 %v1768, %v1933
        %v2017 = vadd.f32 %v1769, %v1935
        %v2018 = vadd.f32 %v1770, %v1938
        %v2019 = vadd.f32 %v1771, %v1940
        %v2020 = vadd.f32 %v1772, %v1943
        %v2021 = vadd.f32 %v1773, %v1945
        %v2022 = vadd.f32 %v1774, %v1948
        %v2023 = vadd.f32 %v1775, %v1950
        %v2024 = vadd.f32 %v1776, %v1953
        %v2025 = vadd.f32 %v1777, %v1955
        %v2026 = vadd.f32 %v1778, %v1958
        %v2027 = vadd.f32 %v1779, %v1960
        %v2028 = vadd.f32 %v1780, %v1963
        %v2029 = vadd.f32 %v1781, %v1965
        %s2030 = scalar_lea.vmem %s4, 5
        %v2031 = vld [vmem:[%s2030] sm:$0x1]
        %v2033 = vlaneseq
        %v2034 = vshrl.u32 %v2033, 7
        %v2035 = vsub.s32 0, %v2034
        %v2036 = vrot.slane %v2031, %v2035
        %v2038 = vmul.f32 %v1090, %v2036
        %v2039 = vmul.f32 %v1091, %v2036
        %v2040 = vmul.f32 %v1092, %v2036
        %v2041 = vmul.f32 %v1093, %v2036
        %v2042 = vmul.f32 %v1094, %v2036
        %v2043 = vmul.f32 %v1095, %v2036
        %v2044 = vmul.f32 %v1096, %v2036
        %v2045 = vmul.f32 %v1097, %v2036
        %v2046 = vmul.f32 %v1098, %v2036
        %v2047 = vmul.f32 %v1099, %v2036
        %v2048 = vmul.f32 %v1100, %v2036
        %v2049 = vmul.f32 %v1101, %v2036
        %v2050 = vmul.f32 %v1102, %v2036
        %v2051 = vmul.f32 %v1103, %v2036
        %v2052 = vmul.f32 %v1104, %v2036
        %v2053 = vmul.f32 %v1105, %v2036
        %v2054 = vmul.f32 %v1106, %v2036
        %v2055 = vmul.f32 %v1107, %v2036
        %v2056 = vmul.f32 %v1108, %v2036
        %v2057 = vmul.f32 %v1109, %v2036
        %v2058 = vmul.f32 %v1110, %v2036
        %v2059 = vmul.f32 %v1111, %v2036
        %v2060 = vmul.f32 %v1112, %v2036
        %v2061 = vmul.f32 %v1113, %v2036
        %v2062 = vmul.f32 %v1114, %v2036
        %v2063 = vmul.f32 %v1115, %v2036
        %v2064 = vmul.f32 %v1116, %v2036
        %v2065 = vmul.f32 %v1117, %v2036
        %v2066 = vmul.f32 %v1118, %v2036
        %v2067 = vmul.f32 %v1119, %v2036
        %v2068 = vmul.f32 %v1120, %v2036
        %v2069 = vmul.f32 %v1121, %v2036
        %v2070 = vmul.f32 %v1122, %v2036
        %v2071 = vmul.f32 %v1123, %v2036
        %v2072 = vmul.f32 %v1124, %v2036
        %v2073 = vmul.f32 %v1125, %v2036
        %v2074 = vmul.f32 %v1126, %v2036
        %v2075 = vmul.f32 %v1127, %v2036
        %v2076 = vmul.f32 %v1128, %v2036
        %v2077 = vmul.f32 %v1129, %v2036
        %v2078 = vmul.f32 %v1130, %v2036
        %v2079 = vmul.f32 %v1131, %v2036
        %v2080 = vmul.f32 %v1132, %v2036
        %v2081 = vmul.f32 %v1133, %v2036
        %v2082 = vmul.f32 %v1134, %v2036
        %v2083 = vmul.f32 %v1135, %v2036
        %v2084 = vmul.f32 %v1136, %v2036
        %v2085 = vmul.f32 %v1137, %v2036
        %v2134 = vrot.slane %v2038, 2
        %v2135 = vrot.slane %v2039, 2
        %v2136 = vsel %vm1565, %v2134, %v2135
        %v2137 = vrot.slane %v2040, 2
        %v2138 = vsel %vm1565, %v2135, %v2137
        %v2139 = vrot.slane %v2041, 2
        %v2140 = vrot.slane %v2042, 2
        %v2141 = vsel %vm1565, %v2139, %v2140
        %v2142 = vrot.slane %v2043, 2
        %v2143 = vsel %vm1565, %v2140, %v2142
        %v2144 = vrot.slane %v2044, 2
        %v2145 = vrot.slane %v2045, 2
        %v2146 = vsel %vm1565, %v2144, %v2145
        %v2147 = vrot.slane %v2046, 2
        %v2148 = vsel %vm1565, %v2145, %v2147
        %v2149 = vrot.slane %v2047, 2
        %v2150 = vrot.slane %v2048, 2
        %v2151 = vsel %vm1565, %v2149, %v2150
        %v2152 = vrot.slane %v2049, 2
        %v2153 = vsel %vm1565, %v2150, %v2152
        %v2154 = vrot.slane %v2050, 2
        %v2155 = vrot.slane %v2051, 2
        %v2156 = vsel %vm1565, %v2154, %v2155
        %v2157 = vrot.slane %v2052, 2
        %v2158 = vsel %vm1565, %v2155, %v2157
        %v2159 = vrot.slane %v2053, 2
        %v2160 = vrot.slane %v2054, 2
        %v2161 = vsel %vm1565, %v2159, %v2160
        %v2162 = vrot.slane %v2055, 2
        %v2163 = vsel %vm1565, %v2160, %v2162
        %v2164 = vrot.slane %v2056, 2
        %v2165 = vrot.slane %v2057, 2
        %v2166 = vsel %vm1565, %v2164, %v2165
        %v2167 = vrot.slane %v2058, 2
        %v2168 = vsel %vm1565, %v2165, %v2167
        %v2169 = vrot.slane %v2059, 2
        %v2170 = vrot.slane %v2060, 2
        %v2171 = vsel %vm1565, %v2169, %v2170
        %v2172 = vrot.slane %v2061, 2
        %v2173 = vsel %vm1565, %v2170, %v2172
        %v2174 = vrot.slane %v2062, 2
        %v2175 = vrot.slane %v2063, 2
        %v2176 = vsel %vm1565, %v2174, %v2175
        %v2177 = vrot.slane %v2064, 2
        %v2178 = vsel %vm1565, %v2175, %v2177
        %v2179 = vrot.slane %v2065, 2
        %v2180 = vrot.slane %v2066, 2
        %v2181 = vsel %vm1565, %v2179, %v2180
        %v2182 = vrot.slane %v2067, 2
        %v2183 = vsel %vm1565, %v2180, %v2182
        %v2184 = vrot.slane %v2068, 2
        %v2185 = vrot.slane %v2069, 2
        %v2186 = vsel %vm1565, %v2184, %v2185
        %v2187 = vrot.slane %v2070, 2
        %v2188 = vsel %vm1565, %v2185, %v2187
        %v2189 = vrot.slane %v2071, 2
        %v2190 = vrot.slane %v2072, 2
        %v2191 = vsel %vm1565, %v2189, %v2190
        %v2192 = vrot.slane %v2073, 2
        %v2193 = vsel %vm1565, %v2190, %v2192
        %v2194 = vrot.slane %v2074, 2
        %v2195 = vrot.slane %v2075, 2
        %v2196 = vsel %vm1565, %v2194, %v2195
        %v2197 = vrot.slane %v2076, 2
        %v2198 = vsel %vm1565, %v2195, %v2197
        %v2199 = vrot.slane %v2077, 2
        %v2200 = vrot.slane %v2078, 2
        %v2201 = vsel %vm1565, %v2199, %v2200
        %v2202 = vrot.slane %v2079, 2
        %v2203 = vsel %vm1565, %v2200, %v2202
        %v2204 = vrot.slane %v2080, 2
        %v2205 = vrot.slane %v2081, 2
        %v2206 = vsel %vm1565, %v2204, %v2205
        %v2207 = vrot.slane %v2082, 2
        %v2208 = vsel %vm1565, %v2205, %v2207
        %v2209 = vrot.slane %v2083, 2
        %v2210 = vrot.slane %v2084, 2
        %v2211 = vsel %vm1565, %v2209, %v2210
        %v2212 = vrot.slane %v2085, 2
        %v2213 = vsel %vm1565, %v2210, %v2212
        %v2246 = vadd.f32 %v1998, %v2136
        %v2247 = vadd.f32 %v1999, %v2138
        %v2248 = vadd.f32 %v2000, %v2141
        %v2249 = vadd.f32 %v2001, %v2143
        %v2250 = vadd.f32 %v2002, %v2146
        %v2251 = vadd.f32 %v2003, %v2148
        %v2252 = vadd.f32 %v2004, %v2151
        %v2253 = vadd.f32 %v2005, %v2153
        %v2254 = vadd.f32 %v2006, %v2156
        %v2255 = vadd.f32 %v2007, %v2158
        %v2256 = vadd.f32 %v2008, %v2161
        %v2257 = vadd.f32 %v2009, %v2163
        %v2258 = vadd.f32 %v2010, %v2166
        %v2259 = vadd.f32 %v2011, %v2168
        %v2260 = vadd.f32 %v2012, %v2171
        %v2261 = vadd.f32 %v2013, %v2173
        %v2262 = vadd.f32 %v2014, %v2176
        %v2263 = vadd.f32 %v2015, %v2178
        %v2264 = vadd.f32 %v2016, %v2181
        %v2265 = vadd.f32 %v2017, %v2183
        %v2266 = vadd.f32 %v2018, %v2186
        %v2267 = vadd.f32 %v2019, %v2188
        %v2268 = vadd.f32 %v2020, %v2191
        %v2269 = vadd.f32 %v2021, %v2193
        %v2270 = vadd.f32 %v2022, %v2196
        %v2271 = vadd.f32 %v2023, %v2198
        %v2272 = vadd.f32 %v2024, %v2201
        %v2273 = vadd.f32 %v2025, %v2203
        %v2274 = vadd.f32 %v2026, %v2206
        %v2275 = vadd.f32 %v2027, %v2208
        %v2276 = vadd.f32 %v2028, %v2211
        %v2277 = vadd.f32 %v2029, %v2213
        %s2278 = scalar_lea.vmem %s4, 6
        %v2279 = vld [vmem:[%s2278] sm:$0x1]
        %v2281 = vlaneseq
        %v2282 = vshrl.u32 %v2281, 7
        %v2283 = vsub.s32 0, %v2282
        %v2284 = vrot.slane %v2279, %v2283
        %v2286 = vmul.f32 %v1093, %v2284
        %v2287 = vmul.f32 %v1094, %v2284
        %v2288 = vmul.f32 %v1096, %v2284
        %v2289 = vmul.f32 %v1097, %v2284
        %v2290 = vmul.f32 %v1099, %v2284
        %v2291 = vmul.f32 %v1100, %v2284
        %v2292 = vmul.f32 %v1102, %v2284
        %v2293 = vmul.f32 %v1103, %v2284
        %v2294 = vmul.f32 %v1105, %v2284
        %v2295 = vmul.f32 %v1106, %v2284
        %v2296 = vmul.f32 %v1108, %v2284
        %v2297 = vmul.f32 %v1109, %v2284
        %v2298 = vmul.f32 %v1111, %v2284
        %v2299 = vmul.f32 %v1112, %v2284
        %v2300 = vmul.f32 %v1114, %v2284
        %v2301 = vmul.f32 %v1115, %v2284
        %v2302 = vmul.f32 %v1117, %v2284
        %v2303 = vmul.f32 %v1118, %v2284
        %v2304 = vmul.f32 %v1120, %v2284
        %v2305 = vmul.f32 %v1121, %v2284
        %v2306 = vmul.f32 %v1123, %v2284
        %v2307 = vmul.f32 %v1124, %v2284
        %v2308 = vmul.f32 %v1126, %v2284
        %v2309 = vmul.f32 %v1127, %v2284
        %v2310 = vmul.f32 %v1129, %v2284
        %v2311 = vmul.f32 %v1130, %v2284
        %v2312 = vmul.f32 %v1132, %v2284
        %v2313 = vmul.f32 %v1133, %v2284
        %v2314 = vmul.f32 %v1135, %v2284
        %v2315 = vmul.f32 %v1136, %v2284
        %v2316 = vmul.f32 %v1138, %v2284
        %v2317 = vmul.f32 %v1139, %v2284
        %v2318 = vadd.f32 %v2246, %v2286
        %v2319 = vadd.f32 %v2247, %v2287
        %v2320 = vadd.f32 %v2248, %v2288
        %v2321 = vadd.f32 %v2249, %v2289
        %v2322 = vadd.f32 %v2250, %v2290
        %v2323 = vadd.f32 %v2251, %v2291
        %v2324 = vadd.f32 %v2252, %v2292
        %v2325 = vadd.f32 %v2253, %v2293
        %v2326 = vadd.f32 %v2254, %v2294
        %v2327 = vadd.f32 %v2255, %v2295
        %v2328 = vadd.f32 %v2256, %v2296
        %v2329 = vadd.f32 %v2257, %v2297
        %v2330 = vadd.f32 %v2258, %v2298
        %v2331 = vadd.f32 %v2259, %v2299
        %v2332 = vadd.f32 %v2260, %v2300
        %v2333 = vadd.f32 %v2261, %v2301
        %v2334 = vadd.f32 %v2262, %v2302
        %v2335 = vadd.f32 %v2263, %v2303
        %v2336 = vadd.f32 %v2264, %v2304
        %v2337 = vadd.f32 %v2265, %v2305
        %v2338 = vadd.f32 %v2266, %v2306
        %v2339 = vadd.f32 %v2267, %v2307
        %v2340 = vadd.f32 %v2268, %v2308
        %v2341 = vadd.f32 %v2269, %v2309
        %v2342 = vadd.f32 %v2270, %v2310
        %v2343 = vadd.f32 %v2271, %v2311
        %v2344 = vadd.f32 %v2272, %v2312
        %v2345 = vadd.f32 %v2273, %v2313
        %v2346 = vadd.f32 %v2274, %v2314
        %v2347 = vadd.f32 %v2275, %v2315
        %v2348 = vadd.f32 %v2276, %v2316
        %v2349 = vadd.f32 %v2277, %v2317
        %s2350 = scalar_lea.vmem %s4, 7
        %v2351 = vld [vmem:[%s2350] sm:$0x1]
        %v2353 = vlaneseq
        %v2354 = vshrl.u32 %v2353, 7
        %v2355 = vsub.s32 0, %v2354
        %v2356 = vrot.slane %v2351, %v2355
        %v2358 = vmul.f32 %v1093, %v2356
        %v2359 = vmul.f32 %v1094, %v2356
        %v2360 = vmul.f32 %v1095, %v2356
        %v2361 = vmul.f32 %v1096, %v2356
        %v2362 = vmul.f32 %v1097, %v2356
        %v2363 = vmul.f32 %v1098, %v2356
        %v2364 = vmul.f32 %v1099, %v2356
        %v2365 = vmul.f32 %v1100, %v2356
        %v2366 = vmul.f32 %v1101, %v2356
        %v2367 = vmul.f32 %v1102, %v2356
        %v2368 = vmul.f32 %v1103, %v2356
        %v2369 = vmul.f32 %v1104, %v2356
        %v2370 = vmul.f32 %v1105, %v2356
        %v2371 = vmul.f32 %v1106, %v2356
        %v2372 = vmul.f32 %v1107, %v2356
        %v2373 = vmul.f32 %v1108, %v2356
        %v2374 = vmul.f32 %v1109, %v2356
        %v2375 = vmul.f32 %v1110, %v2356
        %v2376 = vmul.f32 %v1111, %v2356
        %v2377 = vmul.f32 %v1112, %v2356
        %v2378 = vmul.f32 %v1113, %v2356
        %v2379 = vmul.f32 %v1114, %v2356
        %v2380 = vmul.f32 %v1115, %v2356
        %v2381 = vmul.f32 %v1116, %v2356
        %v2382 = vmul.f32 %v1117, %v2356
        %v2383 = vmul.f32 %v1118, %v2356
        %v2384 = vmul.f32 %v1119, %v2356
        %v2385 = vmul.f32 %v1120, %v2356
        %v2386 = vmul.f32 %v1121, %v2356
        %v2387 = vmul.f32 %v1122, %v2356
        %v2388 = vmul.f32 %v1123, %v2356
        %v2389 = vmul.f32 %v1124, %v2356
        %v2390 = vmul.f32 %v1125, %v2356
        %v2391 = vmul.f32 %v1126, %v2356
        %v2392 = vmul.f32 %v1127, %v2356
        %v2393 = vmul.f32 %v1128, %v2356
        %v2394 = vmul.f32 %v1129, %v2356
        %v2395 = vmul.f32 %v1130, %v2356
        %v2396 = vmul.f32 %v1131, %v2356
        %v2397 = vmul.f32 %v1132, %v2356
        %v2398 = vmul.f32 %v1133, %v2356
        %v2399 = vmul.f32 %v1134, %v2356
        %v2400 = vmul.f32 %v1135, %v2356
        %v2401 = vmul.f32 %v1136, %v2356
        %v2402 = vmul.f32 %v1137, %v2356
        %v2403 = vmul.f32 %v1138, %v2356
        %v2404 = vmul.f32 %v1139, %v2356
        %v2405 = vmul.f32 %v1140, %v2356
        %v2454 = vrot.slane %v2358, 1
        %v2455 = vrot.slane %v2359, 1
        %v2456 = vsel %vm1316, %v2454, %v2455
        %v2457 = vrot.slane %v2360, 1
        %v2458 = vsel %vm1316, %v2455, %v2457
        %v2459 = vrot.slane %v2361, 1
        %v2460 = vrot.slane %v2362, 1
        %v2461 = vsel %vm1316, %v2459, %v2460
        %v2462 = vrot.slane %v2363, 1
        %v2463 = vsel %vm1316, %v2460, %v2462
        %v2464 = vrot.slane %v2364, 1
        %v2465 = vrot.slane %v2365, 1
        %v2466 = vsel %vm1316, %v2464, %v2465
        %v2467 = vrot.slane %v2366, 1
        %v2468 = vsel %vm1316, %v2465, %v2467
        %v2469 = vrot.slane %v2367, 1
        %v2470 = vrot.slane %v2368, 1
        %v2471 = vsel %vm1316, %v2469, %v2470
        %v2472 = vrot.slane %v2369, 1
        %v2473 = vsel %vm1316, %v2470, %v2472
        %v2474 = vrot.slane %v2370, 1
        %v2475 = vrot.slane %v2371, 1
        %v2476 = vsel %vm1316, %v2474, %v2475
        %v2477 = vrot.slane %v2372, 1
        %v2478 = vsel %vm1316, %v2475, %v2477
        %v2479 = vrot.slane %v2373, 1
        %v2480 = vrot.slane %v2374, 1
        %v2481 = vsel %vm1316, %v2479, %v2480
        %v2482 = vrot.slane %v2375, 1
        %v2483 = vsel %vm1316, %v2480, %v2482
        %v2484 = vrot.slane %v2376, 1
        %v2485 = vrot.slane %v2377, 1
        %v2486 = vsel %vm1316, %v2484, %v2485
        %v2487 = vrot.slane %v2378, 1
        %v2488 = vsel %vm1316, %v2485, %v2487
        %v2489 = vrot.slane %v2379, 1
        %v2490 = vrot.slane %v2380, 1
        %v2491 = vsel %vm1316, %v2489, %v2490
        %v2492 = vrot.slane %v2381, 1
        %v2493 = vsel %vm1316, %v2490, %v2492
        %v2494 = vrot.slane %v2382, 1
        %v2495 = vrot.slane %v2383, 1
        %v2496 = vsel %vm1316, %v2494, %v2495
        %v2497 = vrot.slane %v2384, 1
        %v2498 = vsel %vm1316, %v2495, %v2497
        %v2499 = vrot.slane %v2385, 1
        %v2500 = vrot.slane %v2386, 1
        %v2501 = vsel %vm1316, %v2499, %v2500
        %v2502 = vrot.slane %v2387, 1
        %v2503 = vsel %vm1316, %v2500, %v2502
        %v2504 = vrot.slane %v2388, 1
        %v2505 = vrot.slane %v2389, 1
        %v2506 = vsel %vm1316, %v2504, %v2505
        %v2507 = vrot.slane %v2390, 1
        %v2508 = vsel %vm1316, %v2505, %v2507
        %v2509 = vrot.slane %v2391, 1
        %v2510 = vrot.slane %v2392, 1
        %v2511 = vsel %vm1316, %v2509, %v2510
        %v2512 = vrot.slane %v2393, 1
        %v2513 = vsel %vm1316, %v2510, %v2512
        %v2514 = vrot.slane %v2394, 1
        %v2515 = vrot.slane %v2395, 1
        %v2516 = vsel %vm1316, %v2514, %v2515
        %v2517 = vrot.slane %v2396, 1
        %v2518 = vsel %vm1316, %v2515, %v2517
        %v2519 = vrot.slane %v2397, 1
        %v2520 = vrot.slane %v2398, 1
        %v2521 = vsel %vm1316, %v2519, %v2520
        %v2522 = vrot.slane %v2399, 1
        %v2523 = vsel %vm1316, %v2520, %v2522
        %v2524 = vrot.slane %v2400, 1
        %v2525 = vrot.slane %v2401, 1
        %v2526 = vsel %vm1316, %v2524, %v2525
        %v2527 = vrot.slane %v2402, 1
        %v2528 = vsel %vm1316, %v2525, %v2527
        %v2529 = vrot.slane %v2403, 1
        %v2530 = vrot.slane %v2404, 1
        %v2531 = vsel %vm1316, %v2529, %v2530
        %v2532 = vrot.slane %v2405, 1
        %v2533 = vsel %vm1316, %v2530, %v2532
        %v2566 = vadd.f32 %v2318, %v2456
        %v2567 = vadd.f32 %v2319, %v2458
        %v2568 = vadd.f32 %v2320, %v2461
        %v2569 = vadd.f32 %v2321, %v2463
        %v2570 = vadd.f32 %v2322, %v2466
        %v2571 = vadd.f32 %v2323, %v2468
        %v2572 = vadd.f32 %v2324, %v2471
        %v2573 = vadd.f32 %v2325, %v2473
        %v2574 = vadd.f32 %v2326, %v2476
        %v2575 = vadd.f32 %v2327, %v2478
        %v2576 = vadd.f32 %v2328, %v2481
        %v2577 = vadd.f32 %v2329, %v2483
        %v2578 = vadd.f32 %v2330, %v2486
        %v2579 = vadd.f32 %v2331, %v2488
        %v2580 = vadd.f32 %v2332, %v2491
        %v2581 = vadd.f32 %v2333, %v2493
        %v2582 = vadd.f32 %v2334, %v2496
        %v2583 = vadd.f32 %v2335, %v2498
        %v2584 = vadd.f32 %v2336, %v2501
        %v2585 = vadd.f32 %v2337, %v2503
        %v2586 = vadd.f32 %v2338, %v2506
        %v2587 = vadd.f32 %v2339, %v2508
        %v2588 = vadd.f32 %v2340, %v2511
        %v2589 = vadd.f32 %v2341, %v2513
        %v2590 = vadd.f32 %v2342, %v2516
        %v2591 = vadd.f32 %v2343, %v2518
        %v2592 = vadd.f32 %v2344, %v2521
        %v2593 = vadd.f32 %v2345, %v2523
        %v2594 = vadd.f32 %v2346, %v2526
        %v2595 = vadd.f32 %v2347, %v2528
        %v2596 = vadd.f32 %v2348, %v2531
        %v2597 = vadd.f32 %v2349, %v2533
        %s2598 = scalar_lea.vmem %s4, 8
        %v2599 = vld [vmem:[%s2598] sm:$0x1]
        %v2601 = vlaneseq
        %v2602 = vshrl.u32 %v2601, 7
        %v2603 = vsub.s32 0, %v2602
        %v2604 = vrot.slane %v2599, %v2603
        %v2606 = vmul.f32 %v1093, %v2604
        %v2607 = vmul.f32 %v1094, %v2604
        %v2608 = vmul.f32 %v1095, %v2604
        %v2609 = vmul.f32 %v1096, %v2604
        %v2610 = vmul.f32 %v1097, %v2604
        %v2611 = vmul.f32 %v1098, %v2604
        %v2612 = vmul.f32 %v1099, %v2604
        %v2613 = vmul.f32 %v1100, %v2604
        %v2614 = vmul.f32 %v1101, %v2604
        %v2615 = vmul.f32 %v1102, %v2604
        %v2616 = vmul.f32 %v1103, %v2604
        %v2617 = vmul.f32 %v1104, %v2604
        %v2618 = vmul.f32 %v1105, %v2604
        %v2619 = vmul.f32 %v1106, %v2604
        %v2620 = vmul.f32 %v1107, %v2604
        %v2621 = vmul.f32 %v1108, %v2604
        %v2622 = vmul.f32 %v1109, %v2604
        %v2623 = vmul.f32 %v1110, %v2604
        %v2624 = vmul.f32 %v1111, %v2604
        %v2625 = vmul.f32 %v1112, %v2604
        %v2626 = vmul.f32 %v1113, %v2604
        %v2627 = vmul.f32 %v1114, %v2604
        %v2628 = vmul.f32 %v1115, %v2604
        %v2629 = vmul.f32 %v1116, %v2604
        %v2630 = vmul.f32 %v1117, %v2604
        %v2631 = vmul.f32 %v1118, %v2604
        %v2632 = vmul.f32 %v1119, %v2604
        %v2633 = vmul.f32 %v1120, %v2604
        %v2634 = vmul.f32 %v1121, %v2604
        %v2635 = vmul.f32 %v1122, %v2604
        %v2636 = vmul.f32 %v1123, %v2604
        %v2637 = vmul.f32 %v1124, %v2604
        %v2638 = vmul.f32 %v1125, %v2604
        %v2639 = vmul.f32 %v1126, %v2604
        %v2640 = vmul.f32 %v1127, %v2604
        %v2641 = vmul.f32 %v1128, %v2604
        %v2642 = vmul.f32 %v1129, %v2604
        %v2643 = vmul.f32 %v1130, %v2604
        %v2644 = vmul.f32 %v1131, %v2604
        %v2645 = vmul.f32 %v1132, %v2604
        %v2646 = vmul.f32 %v1133, %v2604
        %v2647 = vmul.f32 %v1134, %v2604
        %v2648 = vmul.f32 %v1135, %v2604
        %v2649 = vmul.f32 %v1136, %v2604
        %v2650 = vmul.f32 %v1137, %v2604
        %v2651 = vmul.f32 %v1138, %v2604
        %v2652 = vmul.f32 %v1139, %v2604
        %v2653 = vmul.f32 %v1140, %v2604
        %v2702 = vrot.slane %v2606, 2
        %v2703 = vrot.slane %v2607, 2
        %v2704 = vsel %vm1565, %v2702, %v2703
        %v2705 = vrot.slane %v2608, 2
        %v2706 = vsel %vm1565, %v2703, %v2705
        %v2707 = vrot.slane %v2609, 2
        %v2708 = vrot.slane %v2610, 2
        %v2709 = vsel %vm1565, %v2707, %v2708
        %v2710 = vrot.slane %v2611, 2
        %v2711 = vsel %vm1565, %v2708, %v2710
        %v2712 = vrot.slane %v2612, 2
        %v2713 = vrot.slane %v2613, 2
        %v2714 = vsel %vm1565, %v2712, %v2713
        %v2715 = vrot.slane %v2614, 2
        %v2716 = vsel %vm1565, %v2713, %v2715
        %v2717 = vrot.slane %v2615, 2
        %v2718 = vrot.slane %v2616, 2
        %v2719 = vsel %vm1565, %v2717, %v2718
        %v2720 = vrot.slane %v2617, 2
        %v2721 = vsel %vm1565, %v2718, %v2720
        %v2722 = vrot.slane %v2618, 2
        %v2723 = vrot.slane %v2619, 2
        %v2724 = vsel %vm1565, %v2722, %v2723
        %v2725 = vrot.slane %v2620, 2
        %v2726 = vsel %vm1565, %v2723, %v2725
        %v2727 = vrot.slane %v2621, 2
        %v2728 = vrot.slane %v2622, 2
        %v2729 = vsel %vm1565, %v2727, %v2728
        %v2730 = vrot.slane %v2623, 2
        %v2731 = vsel %vm1565, %v2728, %v2730
        %v2732 = vrot.slane %v2624, 2
        %v2733 = vrot.slane %v2625, 2
        %v2734 = vsel %vm1565, %v2732, %v2733
        %v2735 = vrot.slane %v2626, 2
        %v2736 = vsel %vm1565, %v2733, %v2735
        %v2737 = vrot.slane %v2627, 2
        %v2738 = vrot.slane %v2628, 2
        %v2739 = vsel %vm1565, %v2737, %v2738
        %v2740 = vrot.slane %v2629, 2
        %v2741 = vsel %vm1565, %v2738, %v2740
        %v2742 = vrot.slane %v2630, 2
        %v2743 = vrot.slane %v2631, 2
        %v2744 = vsel %vm1565, %v2742, %v2743
        %v2745 = vrot.slane %v2632, 2
        %v2746 = vsel %vm1565, %v2743, %v2745
        %v2747 = vrot.slane %v2633, 2
        %v2748 = vrot.slane %v2634, 2
        %v2749 = vsel %vm1565, %v2747, %v2748
        %v2750 = vrot.slane %v2635, 2
        %v2751 = vsel %vm1565, %v2748, %v2750
        %v2752 = vrot.slane %v2636, 2
        %v2753 = vrot.slane %v2637, 2
        %v2754 = vsel %vm1565, %v2752, %v2753
        %v2755 = vrot.slane %v2638, 2
        %v2756 = vsel %vm1565, %v2753, %v2755
        %v2757 = vrot.slane %v2639, 2
        %v2758 = vrot.slane %v2640, 2
        %v2759 = vsel %vm1565, %v2757, %v2758
        %v2760 = vrot.slane %v2641, 2
        %v2761 = vsel %vm1565, %v2758, %v2760
        %v2762 = vrot.slane %v2642, 2
        %v2763 = vrot.slane %v2643, 2
        %v2764 = vsel %vm1565, %v2762, %v2763
        %v2765 = vrot.slane %v2644, 2
        %v2766 = vsel %vm1565, %v2763, %v2765
        %v2767 = vrot.slane %v2645, 2
        %v2768 = vrot.slane %v2646, 2
        %v2769 = vsel %vm1565, %v2767, %v2768
        %v2770 = vrot.slane %v2647, 2
        %v2771 = vsel %vm1565, %v2768, %v2770
        %v2772 = vrot.slane %v2648, 2
        %v2773 = vrot.slane %v2649, 2
        %v2774 = vsel %vm1565, %v2772, %v2773
        %v2775 = vrot.slane %v2650, 2
        %v2776 = vsel %vm1565, %v2773, %v2775
        %v2777 = vrot.slane %v2651, 2
        %v2778 = vrot.slane %v2652, 2
        %v2779 = vsel %vm1565, %v2777, %v2778
        %v2780 = vrot.slane %v2653, 2
        %v2781 = vsel %vm1565, %v2778, %v2780
        %v2814 = vadd.f32 %v2566, %v2704
        %v2815 = vadd.f32 %v2567, %v2706
        %v2816 = vadd.f32 %v2568, %v2709
        %v2817 = vadd.f32 %v2569, %v2711
        %v2818 = vadd.f32 %v2570, %v2714
        %v2819 = vadd.f32 %v2571, %v2716
        %v2820 = vadd.f32 %v2572, %v2719
        %v2821 = vadd.f32 %v2573, %v2721
        %v2822 = vadd.f32 %v2574, %v2724
        %v2823 = vadd.f32 %v2575, %v2726
        %v2824 = vadd.f32 %v2576, %v2729
        %v2825 = vadd.f32 %v2577, %v2731
        %v2826 = vadd.f32 %v2578, %v2734
        %v2827 = vadd.f32 %v2579, %v2736
        %v2828 = vadd.f32 %v2580, %v2739
        %v2829 = vadd.f32 %v2581, %v2741
        %v2830 = vadd.f32 %v2582, %v2744
        %v2831 = vadd.f32 %v2583, %v2746
        %v2832 = vadd.f32 %v2584, %v2749
        %v2833 = vadd.f32 %v2585, %v2751
        %v2834 = vadd.f32 %v2586, %v2754
        %v2835 = vadd.f32 %v2587, %v2756
        %v2836 = vadd.f32 %v2588, %v2759
        %v2837 = vadd.f32 %v2589, %v2761
        %v2838 = vadd.f32 %v2590, %v2764
        %v2839 = vadd.f32 %v2591, %v2766
        %v2840 = vadd.f32 %v2592, %v2769
        %v2841 = vadd.f32 %v2593, %v2771
        %v2842 = vadd.f32 %v2594, %v2774
        %v2843 = vadd.f32 %v2595, %v2776
        %v2844 = vadd.f32 %v2596, %v2779
        %v2845 = vadd.f32 %v2597, %v2781
        %v2846 = vld [vmem:[%s5] sm:$0x1]
        %v2848 = vlaneseq
        %v2849 = vshrl.u32 %v2848, 7
        %v2850 = vsub.s32 0, %v2849
        %v2851 = vrot.slane %v2846, %v2850
        %v2853 = vmul.f32 %v2814, %v2851
        %v2854 = vmul.f32 %v2815, %v2851
        %v2855 = vmul.f32 %v2816, %v2851
        %v2856 = vmul.f32 %v2817, %v2851
        %v2857 = vmul.f32 %v2818, %v2851
        %v2858 = vmul.f32 %v2819, %v2851
        %v2859 = vmul.f32 %v2820, %v2851
        %v2860 = vmul.f32 %v2821, %v2851
        %v2861 = vmul.f32 %v2822, %v2851
        %v2862 = vmul.f32 %v2823, %v2851
        %v2863 = vmul.f32 %v2824, %v2851
        %v2864 = vmul.f32 %v2825, %v2851
        %v2865 = vmul.f32 %v2826, %v2851
        %v2866 = vmul.f32 %v2827, %v2851
        %v2867 = vmul.f32 %v2828, %v2851
        %v2868 = vmul.f32 %v2829, %v2851
        %v2869 = vmul.f32 %v2830, %v2851
        %v2870 = vmul.f32 %v2831, %v2851
        %v2871 = vmul.f32 %v2832, %v2851
        %v2872 = vmul.f32 %v2833, %v2851
        %v2873 = vmul.f32 %v2834, %v2851
        %v2874 = vmul.f32 %v2835, %v2851
        %v2875 = vmul.f32 %v2836, %v2851
        %v2876 = vmul.f32 %v2837, %v2851
        %v2877 = vmul.f32 %v2838, %v2851
        %v2878 = vmul.f32 %v2839, %v2851
        %v2879 = vmul.f32 %v2840, %v2851
        %v2880 = vmul.f32 %v2841, %v2851
        %v2881 = vmul.f32 %v2842, %v2851
        %v2882 = vmul.f32 %v2843, %v2851
        %v2883 = vmul.f32 %v2844, %v2851
        %v2884 = vmul.f32 %v2845, %v2851
        %v2885 = vld [vmem:[%s6] sm:$0x1]
        %v2887 = vlaneseq
        %v2888 = vshrl.u32 %v2887, 7
        %v2889 = vsub.s32 0, %v2888
        %v2890 = vrot.slane %v2885, %v2889
        %v2892 = vadd.f32 %v2853, %v2890
        %v2893 = vadd.f32 %v2854, %v2890
        %v2894 = vadd.f32 %v2855, %v2890
        %v2895 = vadd.f32 %v2856, %v2890
        %v2896 = vadd.f32 %v2857, %v2890
        %v2897 = vadd.f32 %v2858, %v2890
        %v2898 = vadd.f32 %v2859, %v2890
        %v2899 = vadd.f32 %v2860, %v2890
        %v2900 = vadd.f32 %v2861, %v2890
        %v2901 = vadd.f32 %v2862, %v2890
        %v2902 = vadd.f32 %v2863, %v2890
        %v2903 = vadd.f32 %v2864, %v2890
        %v2904 = vadd.f32 %v2865, %v2890
        %v2905 = vadd.f32 %v2866, %v2890
        %v2906 = vadd.f32 %v2867, %v2890
        %v2907 = vadd.f32 %v2868, %v2890
        %v2908 = vadd.f32 %v2869, %v2890
        %v2909 = vadd.f32 %v2870, %v2890
        %v2910 = vadd.f32 %v2871, %v2890
        %v2911 = vadd.f32 %v2872, %v2890
        %v2912 = vadd.f32 %v2873, %v2890
        %v2913 = vadd.f32 %v2874, %v2890
        %v2914 = vadd.f32 %v2875, %v2890
        %v2915 = vadd.f32 %v2876, %v2890
        %v2916 = vadd.f32 %v2877, %v2890
        %v2917 = vadd.f32 %v2878, %v2890
        %v2918 = vadd.f32 %v2879, %v2890
        %v2919 = vadd.f32 %v2880, %v2890
        %v2920 = vadd.f32 %v2881, %v2890
        %v2921 = vadd.f32 %v2882, %v2890
        %v2922 = vadd.f32 %v2883, %v2890
        %v2923 = vadd.f32 %v2884, %v2890
        %v2924 = vmax.f32 %v2892, 0.0
        %v2925 = vmax.f32 %v2893, 0.0
        %v2926 = vmax.f32 %v2894, 0.0
        %v2927 = vmax.f32 %v2895, 0.0
        %v2928 = vmax.f32 %v2896, 0.0
        %v2929 = vmax.f32 %v2897, 0.0
        %v2930 = vmax.f32 %v2898, 0.0
        %v2931 = vmax.f32 %v2899, 0.0
        %v2932 = vmax.f32 %v2900, 0.0
        %v2933 = vmax.f32 %v2901, 0.0
        %v2934 = vmax.f32 %v2902, 0.0
        %v2935 = vmax.f32 %v2903, 0.0
        %v2936 = vmax.f32 %v2904, 0.0
        %v2937 = vmax.f32 %v2905, 0.0
        %v2938 = vmax.f32 %v2906, 0.0
        %v2939 = vmax.f32 %v2907, 0.0
        %v2940 = vmax.f32 %v2908, 0.0
        %v2941 = vmax.f32 %v2909, 0.0
        %v2942 = vmax.f32 %v2910, 0.0
        %v2943 = vmax.f32 %v2911, 0.0
        %v2944 = vmax.f32 %v2912, 0.0
        %v2945 = vmax.f32 %v2913, 0.0
        %v2946 = vmax.f32 %v2914, 0.0
        %v2947 = vmax.f32 %v2915, 0.0
        %v2948 = vmax.f32 %v2916, 0.0
        %v2949 = vmax.f32 %v2917, 0.0
        %v2950 = vmax.f32 %v2918, 0.0
        %v2951 = vmax.f32 %v2919, 0.0
        %v2952 = vmax.f32 %v2920, 0.0
        %v2953 = vmax.f32 %v2921, 0.0
        %v2954 = vmax.f32 %v2922, 0.0
        %v2955 = vmax.f32 %v2923, 0.0
        %v2956 = vmin.f32 %v2924, 6.0
        %v2957 = vmin.f32 %v2925, 6.0
        %v2958 = vmin.f32 %v2926, 6.0
        %v2959 = vmin.f32 %v2927, 6.0
        %v2960 = vmin.f32 %v2928, 6.0
        %v2961 = vmin.f32 %v2929, 6.0
        %v2962 = vmin.f32 %v2930, 6.0
        %v2963 = vmin.f32 %v2931, 6.0
        %v2964 = vmin.f32 %v2932, 6.0
        %v2965 = vmin.f32 %v2933, 6.0
        %v2966 = vmin.f32 %v2934, 6.0
        %v2967 = vmin.f32 %v2935, 6.0
        %v2968 = vmin.f32 %v2936, 6.0
        %v2969 = vmin.f32 %v2937, 6.0
        %v2970 = vmin.f32 %v2938, 6.0
        %v2971 = vmin.f32 %v2939, 6.0
        %v2972 = vmin.f32 %v2940, 6.0
        %v2973 = vmin.f32 %v2941, 6.0
        %v2974 = vmin.f32 %v2942, 6.0
        %v2975 = vmin.f32 %v2943, 6.0
        %v2976 = vmin.f32 %v2944, 6.0
        %v2977 = vmin.f32 %v2945, 6.0
        %v2978 = vmin.f32 %v2946, 6.0
        %v2979 = vmin.f32 %v2947, 6.0
        %v2980 = vmin.f32 %v2948, 6.0
        %v2981 = vmin.f32 %v2949, 6.0
        %v2982 = vmin.f32 %v2950, 6.0
        %v2983 = vmin.f32 %v2951, 6.0
        %v2984 = vmin.f32 %v2952, 6.0
        %v2985 = vmin.f32 %v2953, 6.0
        %v2986 = vmin.f32 %v2954, 6.0
        %v2987 = vmin.f32 %v2955, 6.0
        %v2988 = vpack.c.bf16 %v2957, %v2956
        %v2989 = vpack.c.bf16 %v2959, %v2958
        %v2990 = vpack.c.bf16 %v2961, %v2960
        %v2991 = vpack.c.bf16 %v2963, %v2962
        %v2992 = vpack.c.bf16 %v2965, %v2964
        %v2993 = vpack.c.bf16 %v2967, %v2966
        %v2994 = vpack.c.bf16 %v2969, %v2968
        %v2995 = vpack.c.bf16 %v2971, %v2970
        %v2996 = vpack.c.bf16 %v2973, %v2972
        %v2997 = vpack.c.bf16 %v2975, %v2974
        %v2998 = vpack.c.bf16 %v2977, %v2976
        %v2999 = vpack.c.bf16 %v2979, %v2978
        %v3000 = vpack.c.bf16 %v2981, %v2980
        %v3001 = vpack.c.bf16 %v2983, %v2982
        %v3002 = vpack.c.bf16 %v2985, %v2984
        %v3003 = vpack.c.bf16 %v2987, %v2986
        %v3004 = vld [vmem:[%s7] sm:$0xf]
        %v3005 = vld [vmem:[%s7 + $0x4] sm:$0xf]
        %v3006 = vld [vmem:[%s7 + $0x8] sm:$0xf]
        %v3007 = vld [vmem:[%s7 + $0xc] sm:$0xf]
        %v3008 = vld [vmem:[%s7 + $0x10] sm:$0xf]
        %v3009 = vld [vmem:[%s7 + $0x14] sm:$0xf]
        %v3010 = vld [vmem:[%s7 + $0x18] sm:$0xf]
        %v3011 = vld [vmem:[%s7 + $0x1c] sm:$0xf]
        %v3020 = vunpack.c.l.b16 %v3004
        %v3021 = vunpack.c.l.b16 %v3005
        %v3022 = vunpack.c.l.b16 %v3006
        %v3023 = vunpack.c.l.b16 %v3007
        %v3024 = vunpack.c.l.b16 %v3008
        %v3025 = vunpack.c.l.b16 %v3009
        %v3026 = vunpack.c.l.b16 %v3010
        %v3027 = vunpack.c.l.b16 %v3011
        %v3028 = vpack.c.b16 %v3021, %v3020
        %v3029 = vpack.c.b16 %v3023, %v3022
        %v3030 = vpack.c.b16 %v3025, %v3024
        %v3031 = vpack.c.b16 %v3027, %v3026
        %vm3032 = vcmask 261120
        %v3034 = vsel %vm3032, %v3028, 0
        %v3037 = vsel %vm3032, %v3029, 0
        %v3040 = vsel %vm3032, %v3030, 0
        %v3043 = vsel %vm3032, %v3031, 0
        %v3046 = vsel %vm3032, %v2988, 0
        %v3049 = vsel %vm3032, %v2989, 0
        %v3052 = vsel %vm3032, %v2990, 0
        %v3055 = vsel %vm3032, %v2991, 0
        %v3058 = vsel %vm3032, %v2992, 0
        %v3061 = vsel %vm3032, %v2993, 0
        %v3064 = vsel %vm3032, %v2994, 0
        %v3067 = vsel %vm3032, %v2995, 0
        %v3070 = vsel %vm3032, %v2996, 0
        %v3073 = vsel %vm3032, %v2997, 0
        %v3076 = vsel %vm3032, %v2998, 0
        %v3079 = vsel %vm3032, %v2999, 0
        %v3082 = vsel %vm3032, %v3000, 0
        %v3085 = vsel %vm3032, %v3001, 0
        %v3088 = vsel %vm3032, %v3002, 0
        %v3091 = vsel %vm3032, %v3003, 0
        %3093 = vmatprep.subr.bf16.mxu0 0
        %3094 = vmatpush1.bf16.xpose.msra.mxu0 %v3046
        %3095 = vmatprep.subr.bf16.mxu0 0
        %3096 = vmatpush1.bf16.xpose.msra.mxu0 %v3049
        %3097 = vmatprep.subr.bf16.mxu0 0
        %3098 = vmatpush1.bf16.xpose.msra.mxu0 %v3052
        %3099 = vmatprep.subr.bf16.mxu0 0
        %3100 = vmatpush1.bf16.xpose.msra.mxu0 %v3055
        %3101 = vmatprep.subr.bf16.mxu0 0
        %3102 = vmatpush1.bf16.xpose.msra.mxu0 %v3058
        %3103 = vmatprep.subr.bf16.mxu0 0
        %3104 = vmatpush1.bf16.xpose.msra.mxu0 %v3061
        %3105 = vmatprep.subr.bf16.mxu0 0
        %3106 = vmatpush1.bf16.xpose.msra.mxu0 %v3064
        %3107 = vmatprep.subr.bf16.mxu0 0
        %3108 = vmatpush1.bf16.xpose.msra.mxu0 %v3067
        %3109 = vmatprep.subr.bf16.mxu0 0
        %3110 = vmatpush1.bf16.xpose.msra.mxu0 %v3070
        %3111 = vmatprep.subr.bf16.mxu0 0
        %3112 = vmatpush1.bf16.xpose.msra.mxu0 %v3073
        %3113 = vmatprep.subr.bf16.mxu0 0
        %3114 = vmatpush1.bf16.xpose.msra.mxu0 %v3076
        %3115 = vmatprep.subr.bf16.mxu0 0
        %3116 = vmatpush1.bf16.xpose.msra.mxu0 %v3079
        %3117 = vmatprep.subr.bf16.mxu0 0
        %3118 = vmatpush1.bf16.xpose.msra.mxu0 %v3082
        %3119 = vmatprep.subr.bf16.mxu0 0
        %3120 = vmatpush1.bf16.xpose.msra.mxu0 %v3085
        %3121 = vmatprep.subr.bf16.mxu0 0
        %3122 = vmatpush1.bf16.xpose.msra.mxu0 %v3088
        %3123 = vmatprep.subr.bf16.mxu0 0
        %3124 = vmatpush1.bf16.xpose.msra.mxu0 %v3091
        %3125 = vmatprep.mubr.bf16.mxu0 0
        %3126 = vmatmul.mubr.bf16.gmra.mrb[0].mxu0 %v3034
        %v3127 = vpop.f32.mrb[0].mxu0
        %v3128 = vadd.f32 0.0, %v3127
        %v3129 = vpop.f32.mrb[0].mxu0
        %v3130 = vadd.f32 0.0, %v3129
        %v3131 = vpop.f32.mrb[0].mxu0
        %v3132 = vadd.f32 0.0, %v3131
        %v3133 = vpop.f32.mrb[0].mxu0
        %v3134 = vadd.f32 0.0, %v3133
        %3135 = vmatprep.mubr.bf16.mxu0 0
        %3136 = vmatmul.mubr.bf16.gmra.mrb[0].mxu0 %v3037
        %v3137 = vpop.f32.mrb[0].mxu0
        %v3138 = vadd.f32 0.0, %v3137
        %v3139 = vpop.f32.mrb[0].mxu0
        %v3140 = vadd.f32 0.0, %v3139
        %v3141 = vpop.f32.mrb[0].mxu0
        %v3142 = vadd.f32 0.0, %v3141
        %v3143 = vpop.f32.mrb[0].mxu0
        %v3144 = vadd.f32 0.0, %v3143
        %3145 = vmatprep.mubr.bf16.mxu0 0
        %3146 = vmatmul.mubr.bf16.gmra.mrb[0].mxu0 %v3040
        %v3147 = vpop.f32.mrb[0].mxu0
        %v3148 = vadd.f32 0.0, %v3147
        %v3149 = vpop.f32.mrb[0].mxu0
        %v3150 = vadd.f32 0.0, %v3149
        %v3151 = vpop.f32.mrb[0].mxu0
        %v3152 = vadd.f32 0.0, %v3151
        %v3153 = vpop.f32.mrb[0].mxu0
        %v3154 = vadd.f32 0.0, %v3153
        %3155 = vmatprep.mubr.bf16.mxu0 0
        %3156 = vmatmul.mubr.bf16.gmra.mrb[0].mxu0 %v3043
        %v3157 = vpop.f32.mrb[0].mxu0
        %v3158 = vadd.f32 0.0, %v3157
        %v3159 = vpop.f32.mrb[0].mxu0
        %v3160 = vadd.f32 0.0, %v3159
        %v3161 = vpop.f32.mrb[0].mxu0
        %v3162 = vadd.f32 0.0, %v3161
        %v3163 = vpop.f32.mrb[0].mxu0
        %v3164 = vadd.f32 0.0, %v3163
        %3165 = vdwg.mxu0
        %v3166 = vld [vmem:[%s8] sm:$0xff]
        %v3167 = vld [vmem:[%s8 + $0x8] sm:$0xff]
        %v3168 = vld [vmem:[%s8 + $0x10] sm:$0xff]
        %v3169 = vld [vmem:[%s8 + $0x18] sm:$0xff]
        %v3170 = vld [vmem:[%s8 + $0x20] sm:$0xff]
        %v3171 = vld [vmem:[%s8 + $0x28] sm:$0xff]
        %v3172 = vld [vmem:[%s8 + $0x30] sm:$0xff]
        %v3173 = vld [vmem:[%s8 + $0x38] sm:$0xff]
        %3175 = vset.pattern.permute.xlu0 0
        %3176 = vperm.xlu0 %3175, %v3166
        %v3177 = vpop.permute.xlu0 %3176
        %3180 = vset.pattern.permute.xlu0 0
        %3181 = vperm.xlu0 %3180, %v3167
        %v3182 = vpop.permute.xlu0 %3181
        %3185 = vset.pattern.permute.xlu0 0
        %3186 = vperm.xlu0 %3185, %v3168
        %v3187 = vpop.permute.xlu0 %3186
        %3190 = vset.pattern.permute.xlu0 0
        %3191 = vperm.xlu0 %3190, %v3169
        %v3192 = vpop.permute.xlu0 %3191
        %3195 = vset.pattern.permute.xlu0 0
        %3196 = vperm.xlu0 %3195, %v3170
        %v3197 = vpop.permute.xlu0 %3196
        %3200 = vset.pattern.permute.xlu0 0
        %3201 = vperm.xlu0 %3200, %v3171
        %v3202 = vpop.permute.xlu0 %3201
        %3205 = vset.pattern.permute.xlu0 0
        %3206 = vperm.xlu0 %3205, %v3172
        %v3207 = vpop.permute.xlu0 %3206
        %3210 = vset.pattern.permute.xlu0 0
        %3211 = vperm.xlu0 %3210, %v3173
        %v3212 = vpop.permute.xlu0 %3211
        %v3214 = vmul.f32 %v3128, %v3177
        %v3215 = vmul.f32 %v3130, %v3177
        %v3216 = vmul.f32 %v3132, %v3182
        %v3217 = vmul.f32 %v3134, %v3182
        %v3218 = vmul.f32 %v3138, %v3187
        %v3219 = vmul.f32 %v3140, %v3187
        %v3220 = vmul.f32 %v3142, %v3192
        %v3221 = vmul.f32 %v3144, %v3192
        %v3222 = vmul.f32 %v3148, %v3197
        %v3223 = vmul.f32 %v3150, %v3197
        %v3224 = vmul.f32 %v3152, %v3202
        %v3225 = vmul.f32 %v3154, %v3202
        %v3226 = vmul.f32 %v3158, %v3207
        %v3227 = vmul.f32 %v3160, %v3207
        %v3228 = vmul.f32 %v3162, %v3212
        %v3229 = vmul.f32 %v3164, %v3212
        %v3230 = vld [vmem:[%s9] sm:$0xff]
        %v3231 = vld [vmem:[%s9 + $0x8] sm:$0xff]
        %v3232 = vld [vmem:[%s9 + $0x10] sm:$0xff]
        %v3233 = vld [vmem:[%s9 + $0x18] sm:$0xff]
        %v3234 = vld [vmem:[%s9 + $0x20] sm:$0xff]
        %v3235 = vld [vmem:[%s9 + $0x28] sm:$0xff]
        %v3236 = vld [vmem:[%s9 + $0x30] sm:$0xff]
        %v3237 = vld [vmem:[%s9 + $0x38] sm:$0xff]
        %3239 = vset.pattern.permute.xlu0 0
        %3240 = vperm.xlu0 %3239, %v3230
        %v3241 = vpop.permute.xlu0 %3240
        %3244 = vset.pattern.permute.xlu0 0
        %3245 = vperm.xlu0 %3244, %v3231
        %v3246 = vpop.permute.xlu0 %3245
        %3249 = vset.pattern.permute.xlu0 0
        %3250 = vperm.xlu0 %3249, %v3232
        %v3251 = vpop.permute.xlu0 %3250
        %3254 = vset.pattern.permute.xlu0 0
        %3255 = vperm.xlu0 %3254, %v3233
        %v3256 = vpop.permute.xlu0 %3255
        %3259 = vset.pattern.permute.xlu0 0
        %3260 = vperm.xlu0 %3259, %v3234
        %v3261 = vpop.permute.xlu0 %3260
        %3264 = vset.pattern.permute.xlu0 0
        %3265 = vperm.xlu0 %3264, %v3235
        %v3266 = vpop.permute.xlu0 %3265
        %3269 = vset.pattern.permute.xlu0 0
        %3270 = vperm.xlu0 %3269, %v3236
        %v3271 = vpop.permute.xlu0 %3270
        %3274 = vset.pattern.permute.xlu0 0
        %3275 = vperm.xlu0 %3274, %v3237
        %v3276 = vpop.permute.xlu0 %3275
        %v3278 = vadd.f32 %v3214, %v3241
        %v3279 = vadd.f32 %v3215, %v3241
        %v3280 = vadd.f32 %v3216, %v3246
        %v3281 = vadd.f32 %v3217, %v3246
        %v3282 = vadd.f32 %v3218, %v3251
        %v3283 = vadd.f32 %v3219, %v3251
        %v3284 = vadd.f32 %v3220, %v3256
        %v3285 = vadd.f32 %v3221, %v3256
        %v3286 = vadd.f32 %v3222, %v3261
        %v3287 = vadd.f32 %v3223, %v3261
        %v3288 = vadd.f32 %v3224, %v3266
        %v3289 = vadd.f32 %v3225, %v3266
        %v3290 = vadd.f32 %v3226, %v3271
        %v3291 = vadd.f32 %v3227, %v3271
        %v3292 = vadd.f32 %v3228, %v3276
        %v3293 = vadd.f32 %v3229, %v3276
        %3294 = vst [vmem:[%s352] sm:$0xff] %v3278
        %3295 = vst [vmem:[%s352 + $0x8] sm:$0xff] %v3279
        %3296 = vst [vmem:[%s352 + $0x10] sm:$0xff] %v3280
        %3297 = vst [vmem:[%s352 + $0x18] sm:$0xff] %v3281
        %3298 = vst [vmem:[%s352 + $0x20] sm:$0xff] %v3282
        %3299 = vst [vmem:[%s352 + $0x28] sm:$0xff] %v3283
        %3300 = vst [vmem:[%s352 + $0x30] sm:$0xff] %v3284
        %3301 = vst [vmem:[%s352 + $0x38] sm:$0xff] %v3285
        %3302 = vst [vmem:[%s352 + $0x40] sm:$0xff] %v3286
        %3303 = vst [vmem:[%s352 + $0x48] sm:$0xff] %v3287
        %3304 = vst [vmem:[%s352 + $0x50] sm:$0xff] %v3288
        %3305 = vst [vmem:[%s352 + $0x58] sm:$0xff] %v3289
        %3306 = vst [vmem:[%s352 + $0x60] sm:$0xff] %v3290
        %3307 = vst [vmem:[%s352 + $0x68] sm:$0xff] %v3291
        %3308 = vst [vmem:[%s352 + $0x70] sm:$0xff] %v3292
        %3309 = vst [vmem:[%s352 + $0x78] sm:$0xff] %v3293
        %s3310 = sand.u32 %s247, 1
        %s3311 = scalar_lea.sflag [#allocation3], %s3310
        %s3312 = sand.u32 %s247, 1
        %s3313 = smul.addr %s3312, 128
        %s3314 = scalar_lea.vmem [#allocation2], %s3313
        // Predicated region
        $region61: #{tpu_custom_call.1} parent=59 // pred_check
          %p3315 = pneg %p257
        $region62: #{tpu_custom_call.1} parent=59 // pred_check_branch
          %3317 = sbr.rel (%p3315) target = $region64
        $region63: #{tpu_custom_call.1} parent=59 // pred_region
          %s3319 = ssub.s32 2048, 2048
          %3320 = vsyncadd %s3311, %s3319
          %s3321 = smul.addr %s24, 16
          %s3322 = smul.addr %s3321, 128
          %s3323 = scalar_lea.hbm %s10, %s3322
          %s3324 = sshll.u32 %s3314, 4
          %s3325 = int_to_ptr.vmem [resolvable:$true] %s3324
          %3330 = dma.vmem_to_hbm [thread:$0]  %s3325, 2048, %s3323, %s3311, 256, 256, 16
        $region64: #{tpu_custom_call.1} parent=59 // pred_fallthru
          _
      $region60: #{tpu_custom_call.1} parent=5 // pred_fallthru
        _
      %p3331 = scmp.le.s32.totalorder 2, %s19
      // Predicated region
      $region65: #{tpu_custom_call.1} parent=5 // pred_check
        %p3332 = pneg %p3331
      $region66: #{tpu_custom_call.1} parent=5 // pred_check_branch
        %3334 = sbr.rel (%p3332) target = $region68
      $region67: #{tpu_custom_call.1} parent=5 // pred_region
        %s3335 = ssub.s32 %s19, 2
        // Predicated region
        $region69: #{tpu_custom_call.1} parent=67 // pred_check
          %p3336 = pneg %p263
        $region70: #{tpu_custom_call.1} parent=67 // pred_check_branch
          %3338 = sbr.rel (%p3336) target = $region72
        $region71: #{tpu_custom_call.1} parent=67 // pred_region
          %s3339 = sand.u32 %s248, 1
          %s3340 = scalar_lea.sflag [#allocation3], %s3339
          %s3341 = sand.u32 %s248, 1
          %s3342 = smul.addr %s3341, 128
          %s3343 = scalar_lea.vmem [#allocation2], %s3342
          %3344 = dma.done %s3340, 2048
        $region72: #{tpu_custom_call.1} parent=67 // pred_fallthru
          _
      $region68: #{tpu_custom_call.1} parent=5 // pred_fallthru
        _
    $region6: #{tpu_custom_call.1} parent=1 // loop_footer
      %s23 = sadd.s32 1, %s19
    $region7: #{tpu_custom_call.1} parent=1 // loop_footer_branch
      %18 = sbr.rel target = $region3
    $region8: #{tpu_custom_call.1} parent=1 // loop_exit
      _
    %3345 = vsyncpa [#allocation3], 1
    %s3346 = scalar_lea.sflag [#allocation3], 1
    %3347 = vsyncpa %s3346, 1

</llo_original>
